<compile_context>
chip_gen: v7x
topology: tpu7x:2x2x1
jax: 0.10.0
libtpu: 0.0.40
codegen_flags: <defaults>
</compile_context>

<pallas_src>
import functools

import jax
import jax.numpy as jnp
import numpy as np
from jax.experimental import pallas as pl
from jax.experimental.pallas import tpu as pltpu


def _round_up(x, m):
    return ((x + m - 1) // m) * m


# ---------------------------------------------------------------------------
# Kernel 1: fused product quantization (+ quantization-loss terms)
# ---------------------------------------------------------------------------
def _pq_kernel(x_ref, ct_ref, cn_ref, out_ref, err_ref, *, k):
    x = x_ref[...]                       # (bn, D) f32 feature rows
    ct = ct_ref[...]                     # (L, D) f32 block-diagonal codebook C^T

    # Distance up to a per-row constant:  |c|^2 - 2 x.c   (|x|^2 is constant
    # within a codebook block and does not change the argmin).  Single
    # lane-dense MXU matmul instead of M tiny (N, d) x (d, k) matmuls.
    scores = jax.lax.dot_general(
        x, ct, (((1,), (1,)), ((), ())),
        preferred_element_type=jnp.float32)          # (bn, L)
    adj = cn_ref[...] - 2.0 * scores                 # (bn, L), L = M * k

    bn, L = adj.shape
    lane = jax.lax.broadcasted_iota(jnp.int32, (bn, L), 1)

    # Segmented first-argmin over each codebook block of k lanes via a
    # doubling butterfly of lane rotations.  Both rotation directions are
    # combined each step and out-of-block partners are masked (so the result
    # is independent of the roll sign convention); ceil(log2(k)) steps, XLU
    # rolls + VPU selects only.
    val, idx = adj, lane
    inf = jnp.float32(jnp.inf)
    s = 1
    while s < k:                                     # static unroll
        for shift in (s, L - s):
            pv = pltpu.roll(val, shift, axis=1)
            pi = pltpu.roll(idx, shift, axis=1)
            ok = jnp.bitwise_xor(pi, lane) < k       # partner stays in my block
            pv = jnp.where(ok, pv, inf)
            take = (pv < val) | ((pv == val) & (pi < idx))   # first-min tie-break
            val = jnp.where(take, pv, val)
            idx = jnp.where(take, pi, idx)
        s *= 2

    # One-hot gather: exactly one 1 per block per row, so a single matmul
    # against the block-diagonal codebook assembles the quantized rows with a
    # lane-dense (bn, D) output.
    onehot = (idx == lane).astype(jnp.float32)       # (bn, L)
    quant = jnp.dot(onehot, ct, preferred_element_type=jnp.float32)  # (bn, D)
    out_ref[...] = quant

    # Fused quantization-loss term: per-row squared error (both STE loss terms
    # share this forward value); avoids a second kernel re-reading HBM.
    diff = quant - x
    err_ref[...] = jnp.sum(diff * diff, axis=1, keepdims=True)


def product_quantize(feats, c_t, c_norm, *, k, block_n=128):
    """Product-quantize row-major features against a block-diagonal codebook.

    feats:  (N, D) f32
    c_t:    (M*k, D) f32 block-diagonal (C^T)
    c_norm: (1, M*k) f32 squared codeword norms (precomputed once)
    Returns (quantized (N, D) f32, per-row squared error (N, 1) f32).
    """
    N, D = feats.shape
    L = c_t.shape[0]
    assert k & (k - 1) == 0 and k > 0, "codebook size k must be a power of two"
    assert L % k == 0 and c_t.shape[1] == D

    bn = min(block_n, _round_up(N, 8))               # rows per grid step
    n_pad = _round_up(N, bn)
    x = jnp.pad(feats, ((0, n_pad - N), (0, 0))) if n_pad != N else feats

    kernel = functools.partial(_pq_kernel, k=k)
    # NOTE: the codebook stays VMEM-resident across the (parallel) N grid.
    # For the full-size module (M=32, k=256, D=512 -> 16 MiB codebook) one
    # would tile the L axis or raise vmem_limit_bytes accordingly.
    quant, row_sq = pl.pallas_call(
        kernel,
        out_shape=(jax.ShapeDtypeStruct((n_pad, D), jnp.float32),
                   jax.ShapeDtypeStruct((n_pad, 1), jnp.float32)),
        grid=(n_pad // bn,),
        in_specs=[
            pl.BlockSpec((bn, D), lambda i: (i, 0)),     # feature tile
            pl.BlockSpec((L, D), lambda i: (0, 0)),      # codebook (resident)
            pl.BlockSpec((1, L), lambda i: (0, 0)),      # codeword norms
        ],
        out_specs=(
            pl.BlockSpec((bn, D), lambda i: (i, 0)),     # quantized rows
            pl.BlockSpec((bn, 1), lambda i: (i, 0)),     # per-row sq. error
        ),
        compiler_params=pltpu.CompilerParams(
            dimension_semantics=("parallel",),
            vmem_limit_bytes=32 * 1024 * 1024),
    )(x, c_t, c_norm)
    return quant[:N], row_sq[:N]


def _block_diag_centroids(centroids):
    """(M, k, d) -> (M*k, M*d) with C_T[m*k + j, m*d:(m+1)*d] = centroids[m, j]."""
    M, k, d = centroids.shape
    eye = jnp.eye(M, dtype=centroids.dtype)
    c4 = jnp.einsum("mkd,mn->mknd", centroids, eye)      # (M, k, M, d)
    return c4.reshape(M * k, M * d)


# ---------------------------------------------------------------------------
# Kernel 2: tiled similarity   sim = 100 * A @ B.T   (bf16 in, f32 out)
# ---------------------------------------------------------------------------
def _sim_kernel(a_ref, b_ref, o_ref):
    o_ref[...] = 100.0 * jax.lax.dot_general(
        a_ref[...], b_ref[...], (((1,), (1,)), ((), ())),
        preferred_element_type=jnp.float32)


def similarity(a, b, *, tile_m=256, tile_n=512, use_bf16=True):
    """a: (Na, D), b: (Nb, D) -> 100 * a @ b.T, shape (Na, Nb), f32."""
    if use_bf16:                                     # module runs fp16; bf16 on TPU
        a = a.astype(jnp.bfloat16)
        b = b.astype(jnp.bfloat16)
    Na, D = a.shape
    Nb, _ = b.shape
    # Tile sizes chosen to fit v7x's smaller VMEM with double buffering while
    # keeping lane-dense (multiple-of-128) output stores; clamped for tiny N.
    tm = min(tile_m, _round_up(Na, 8))
    tn = min(tile_n, _round_up(Nb, 128))
    na_p, nb_p = _round_up(Na, tm), _round_up(Nb, tn)
    a = jnp.pad(a, ((0, na_p - Na), (0, 0)))
    b = jnp.pad(b, ((0, nb_p - Nb), (0, 0)))

    out = pl.pallas_call(
        _sim_kernel,
        out_shape=jax.ShapeDtypeStruct((na_p, nb_p), jnp.float32),
        grid=(na_p // tm, nb_p // tn),
        in_specs=[
            pl.BlockSpec((tm, D), lambda i, j: (i, 0)),
            pl.BlockSpec((tn, D), lambda i, j: (j, 0)),
        ],
        out_specs=pl.BlockSpec((tm, tn), lambda i, j: (i, j)),
        compiler_params=pltpu.CompilerParams(
            dimension_semantics=("parallel", "parallel"),
            vmem_limit_bytes=32 * 1024 * 1024),
    )(a, b)
    return out[:Na, :Nb]


# ---------------------------------------------------------------------------
# Module-level forward
# ---------------------------------------------------------------------------
@functools.partial(jax.jit, static_argnames=("alpha", "beta"))
def clip_quantized_forward(image_feat, text_feat, centroids, alpha=1.0, beta=1.0):
    centroids = centroids.astype(jnp.float32)
    M, k, d = centroids.shape
    D = M * d
    n_img = image_feat.shape[0]
    assert image_feat.shape[1] == D and text_feat.shape[1] == D

    # Fuse image + text quantization into one kernel call (better MXU fill,
    # half the launches).
    feats = jnp.concatenate([image_feat.astype(jnp.float32),
                             text_feat.astype(jnp.float32)], axis=0)

    c_t = _block_diag_centroids(centroids)                       # (M*k, D)
    c_norm = jnp.sum(centroids * centroids, axis=2).reshape(1, M * k)

    quant, row_sq = product_quantize(feats, c_t, c_norm, k=k)

    # Straight-through estimator: forward value == quantized output.
    ste = jax.lax.stop_gradient(quant - feats) + feats
    img_q, txt_q = ste[:n_img], ste[n_img:]

    # alpha*mean(sum((out-vec.detach)^2)) + beta*mean(sum((out.detach-vec)^2))
    # -> same forward value for both terms.
    img_loss = (alpha + beta) * jnp.mean(row_sq[:n_img])
    txt_loss = (alpha + beta) * jnp.mean(row_sq[n_img:])
    quant_loss = img_loss + txt_loss

    sim_i2t = similarity(img_q, txt_q)     # 100 * img @ txt.T (bf16 in, f32 acc)
    sim_t2i = sim_i2t.T                    # == 100 * txt @ img.T (no 2nd matmul)
    return sim_i2t, sim_t2i, quant_loss


# ---------------------------------------------------------------------------
# Pure-JAX reference for correctness checking
# ---------------------------------------------------------------------------
def reference_forward(image_feat, text_feat, centroids, alpha, beta):
    M, k, d = centroids.shape

    def enc(feat):
        N, D = feat.shape
        vec = feat.reshape(N, M, d)
        # |x|^2 is constant per (row, subspace) and does not affect the
        # argmin, so both kernel and reference drop it.
        c_norm = jnp.sum(centroids ** 2, axis=2)[None]               # (1,M,k)
        score = c_norm - 2.0 * jnp.einsum("mkd,nmd->nmk", centroids, vec)
        idx = jnp.argmin(score, axis=2)                              # (N,M)
        out = jnp.take_along_axis(
            centroids[None], idx[:, :, None, None], axis=2)[:, :, 0, :]
        out = out.reshape(N, D)
        loss = (alpha + beta) * jnp.mean(jnp.sum((out - feat) ** 2, -1))
        ste = (out - feat) + feat
        return ste, loss

    iq, il = enc(image_feat)
    tq, tl = enc(text_feat)
    # Mirror the kernel's bf16 similarity inputs for an apples-to-apples check.
    iqb = iq.astype(jnp.bfloat16).astype(jnp.float32)
    tqb = tq.astype(jnp.bfloat16).astype(jnp.float32)
    return 100.0 * iqb @ tqb.T, 100.0 * tqb @ iqb.T, il + tl


if __name__ == "__main__":
    # Small shapes consistent with the module (D = M * d, k codewords / book).
    M, k, D = 8, 64, 128
    d = D // M
    Bi, Bt = 4, 4
    alpha, beta = 1.0, 1.0

    key = jax.random.PRNGKey(0)
    k_img, k_txt, k_wimg, k_wtxt, k_cent = jax.random.split(key, 5)

    # Synthetic raw inputs (NCHW image, token ids for text).
    image = jax.random.normal(k_img, (Bi, 3, 16, 16), dtype=jnp.float32)
    text = jax.random.randint(k_txt, (Bt, 8), 0, 100).astype(jnp.float32)

    # Deterministic stand-in encoders (TODO(synk): replaces CLIP backbone).
    w_img = jax.random.normal(k_wimg, (3 * 16 * 16, D), jnp.float32) * 0.05
    w_txt = jax.random.normal(k_wtxt, (8, D), jnp.float32) * 0.05
    image_feat = image.reshape(Bi, -1) @ w_img                     # (Bi, D)
    text_feat = text @ w_txt                                       # (Bt, D)

    # Xavier-uniform centroids (fan_in = k*d, fan_out = M*d), as in __init__.
    bound = float(np.sqrt(6.0 / (k * d + M * d)))
    centroids = jax.random.uniform(
        k_cent, (M, k, d), jnp.float32, minval=-bound, maxval=bound)

    sim_i2t, sim_t2i, q_loss = clip_quantized_forward(
        image_feat, text_feat, centroids, alpha=alpha, beta=beta)
    jax.block_until_ready((sim_i2t, sim_t2i, q_loss))

    # Correctness check against pure-JAX reference.
    r_i2t, r_t2i, r_loss = reference_forward(
        image_feat, text_feat, centroids, alpha, beta)
    np.testing.assert_allclose(np.asarray(sim_i2t), np.asarray(r_i2t),
                               rtol=1e-3, atol=1e-2)
    np.testing.assert_allclose(np.asarray(sim_t2i), np.asarray(r_t2i),
                               rtol=1e-3, atol=1e-2)
    np.testing.assert_allclose(float(q_loss), float(r_loss),
                               rtol=1e-4, atol=1e-4)

    print("KERNEL_OK")
</pallas_src>

<mosaic_0001>
module attributes {stable_mosaic.version = 11 : i64} {
  func.func @_pq_kernel(%arg0: i32, %arg1: memref<8x128xf32, #tpu.memory_space<vmem>>, %arg2: memref<512x128xf32, #tpu.memory_space<vmem>>, %arg3: memref<1x512xf32, #tpu.memory_space<vmem>>, %arg4: memref<8x128xf32, #tpu.memory_space<vmem>>, %arg5: memref<8x1xf32, #tpu.memory_space<vmem>>) attributes {dimension_semantics = [#tpu.dimension_semantics<parallel>], iteration_bounds = array<i64: 1>, scalar_prefetch = 0 : i64, scratch_operands = 0 : i64, tpu.core_type = #tpu.core_type<tc>, window_params = [{transform_indices = @transform_0, window_bounds = array<i64: 8, 128>}, {pipeline_mode = #tpu.pipeline_mode<synchronous>, transform_indices = @transform_1, window_bounds = array<i64: 512, 128>}, {pipeline_mode = #tpu.pipeline_mode<synchronous>, transform_indices = @transform_2, window_bounds = array<i64: 1, 512>}, {transform_indices = @transform_3, window_bounds = array<i64: 8, 128>}, {transform_indices = @transform_4, window_bounds = array<i64: 8, 1>}]} {
    %c0 = arith.constant 0 : index
    %c0_0 = arith.constant 0 : index
    %0 = vector.load %arg1[%c0, %c0_0] : memref<8x128xf32, #tpu.memory_space<vmem>>, vector<8x128xf32>
    %c0_1 = arith.constant 0 : index
    %c0_2 = arith.constant 0 : index
    %1 = vector.load %arg2[%c0_1, %c0_2] : memref<512x128xf32, #tpu.memory_space<vmem>>, vector<512x128xf32>
    %cst = arith.constant dense<0.000000e+00> : vector<8x512xf32>
    %2 = tpu.matmul %0, %1, %cst {dimension_numbers = #tpu.dot_dimension_numbers<[1], [1], [0], [0], [0, 0, 1, 0], [], []>} : vector<8x128xf32>, vector<512x128xf32>, vector<8x512xf32> -> vector<8x512xf32>
    %c0_3 = arith.constant 0 : index
    %c0_4 = arith.constant 0 : index
    %3 = vector.load %arg3[%c0_3, %c0_4] : memref<1x512xf32, #tpu.memory_space<vmem>>, vector<1x512xf32>
    %cst_5 = arith.constant 2.000000e+00 : f32
    %4 = vector.broadcast %cst_5 : f32 to vector<8x512xf32>
    %5 = arith.mulf %4, %2 : vector<8x512xf32>
    %6 = vector.broadcast %3 : vector<1x512xf32> to vector<8x512xf32>
    %7 = arith.subf %6, %5 : vector<8x512xf32>
    %8 = tpu.iota {dimensions = array<i32: 1>} : vector<8x512xi32>
    %c1_i32 = arith.constant 1 : i32
    %9 = tpu.dynamic_rotate %7 by %c1_i32 dim 1 : vector<8x512xf32>, i32 -> vector<8x512xf32>
    %c1_i32_6 = arith.constant 1 : i32
    %10 = tpu.dynamic_rotate %8 by %c1_i32_6 dim 1 : vector<8x512xi32>, i32 -> vector<8x512xi32>
    %11 = arith.xori %10, %8 : vector<8x512xi32>
    %c64_i32 = arith.constant 64 : i32
    %12 = vector.broadcast %c64_i32 : i32 to vector<8x512xi32>
    %13 = arith.cmpi slt, %11, %12 : vector<8x512xi32>
    %cst_7 = arith.constant 0x7F800000 : f32
    %14 = vector.broadcast %cst_7 : f32 to vector<8x512xf32>
    %15 = arith.select %13, %9, %14 : vector<8x512xi1>, vector<8x512xf32>
    %16 = arith.cmpf olt, %15, %7 : vector<8x512xf32>
    %17 = arith.cmpf oeq, %15, %7 : vector<8x512xf32>
    %18 = arith.cmpi slt, %10, %8 : vector<8x512xi32>
    %19 = arith.andi %17, %18 : vector<8x512xi1>
    %20 = arith.ori %16, %19 : vector<8x512xi1>
    %21 = arith.select %20, %15, %7 : vector<8x512xi1>, vector<8x512xf32>
    %22 = arith.select %20, %10, %8 : vector<8x512xi1>, vector<8x512xi32>
    %c511_i32 = arith.constant 511 : i32
    %23 = tpu.dynamic_rotate %21 by %c511_i32 dim 1 : vector<8x512xf32>, i32 -> vector<8x512xf32>
    %c511_i32_8 = arith.constant 511 : i32
    %24 = tpu.dynamic_rotate %22 by %c511_i32_8 dim 1 : vector<8x512xi32>, i32 -> vector<8x512xi32>
    %25 = arith.xori %24, %8 : vector<8x512xi32>
    %c64_i32_9 = arith.constant 64 : i32
    %26 = vector.broadcast %c64_i32_9 : i32 to vector<8x512xi32>
    %27 = arith.cmpi slt, %25, %26 : vector<8x512xi32>
    %cst_10 = arith.constant 0x7F800000 : f32
    %28 = vector.broadcast %cst_10 : f32 to vector<8x512xf32>
    %29 = arith.select %27, %23, %28 : vector<8x512xi1>, vector<8x512xf32>
    %30 = arith.cmpf olt, %29, %21 : vector<8x512xf32>
    %31 = arith.cmpf oeq, %29, %21 : vector<8x512xf32>
    %32 = arith.cmpi slt, %24, %22 : vector<8x512xi32>
    %33 = arith.andi %31, %32 : vector<8x512xi1>
    %34 = arith.ori %30, %33 : vector<8x512xi1>
    %35 = arith.select %34, %29, %21 : vector<8x512xi1>, vector<8x512xf32>
    %36 = arith.select %34, %24, %22 : vector<8x512xi1>, vector<8x512xi32>
    %c2_i32 = arith.constant 2 : i32
    %37 = tpu.dynamic_rotate %35 by %c2_i32 dim 1 : vector<8x512xf32>, i32 -> vector<8x512xf32>
    %c2_i32_11 = arith.constant 2 : i32
    %38 = tpu.dynamic_rotate %36 by %c2_i32_11 dim 1 : vector<8x512xi32>, i32 -> vector<8x512xi32>
    %39 = arith.xori %38, %8 : vector<8x512xi32>
    %c64_i32_12 = arith.constant 64 : i32
    %40 = vector.broadcast %c64_i32_12 : i32 to vector<8x512xi32>
    %41 = arith.cmpi slt, %39, %40 : vector<8x512xi32>
    %cst_13 = arith.constant 0x7F800000 : f32
    %42 = vector.broadcast %cst_13 : f32 to vector<8x512xf32>
    %43 = arith.select %41, %37, %42 : vector<8x512xi1>, vector<8x512xf32>
    %44 = arith.cmpf olt, %43, %35 : vector<8x512xf32>
    %45 = arith.cmpf oeq, %43, %35 : vector<8x512xf32>
    %46 = arith.cmpi slt, %38, %36 : vector<8x512xi32>
    %47 = arith.andi %45, %46 : vector<8x512xi1>
    %48 = arith.ori %44, %47 : vector<8x512xi1>
    %49 = arith.select %48, %43, %35 : vector<8x512xi1>, vector<8x512xf32>
    %50 = arith.select %48, %38, %36 : vector<8x512xi1>, vector<8x512xi32>
    %c510_i32 = arith.constant 510 : i32
    %51 = tpu.dynamic_rotate %49 by %c510_i32 dim 1 : vector<8x512xf32>, i32 -> vector<8x512xf32>
    %c510_i32_14 = arith.constant 510 : i32
    %52 = tpu.dynamic_rotate %50 by %c510_i32_14 dim 1 : vector<8x512xi32>, i32 -> vector<8x512xi32>
    %53 = arith.xori %52, %8 : vector<8x512xi32>
    %c64_i32_15 = arith.constant 64 : i32
    %54 = vector.broadcast %c64_i32_15 : i32 to vector<8x512xi32>
    %55 = arith.cmpi slt, %53, %54 : vector<8x512xi32>
    %cst_16 = arith.constant 0x7F800000 : f32
    %56 = vector.broadcast %cst_16 : f32 to vector<8x512xf32>
    %57 = arith.select %55, %51, %56 : vector<8x512xi1>, vector<8x512xf32>
    %58 = arith.cmpf olt, %57, %49 : vector<8x512xf32>
    %59 = arith.cmpf oeq, %57, %49 : vector<8x512xf32>
    %60 = arith.cmpi slt, %52, %50 : vector<8x512xi32>
    %61 = arith.andi %59, %60 : vector<8x512xi1>
    %62 = arith.ori %58, %61 : vector<8x512xi1>
    %63 = arith.select %62, %57, %49 : vector<8x512xi1>, vector<8x512xf32>
    %64 = arith.select %62, %52, %50 : vector<8x512xi1>, vector<8x512xi32>
    %c4_i32 = arith.constant 4 : i32
    %65 = tpu.dynamic_rotate %63 by %c4_i32 dim 1 : vector<8x512xf32>, i32 -> vector<8x512xf32>
    %c4_i32_17 = arith.constant 4 : i32
    %66 = tpu.dynamic_rotate %64 by %c4_i32_17 dim 1 : vector<8x512xi32>, i32 -> vector<8x512xi32>
    %67 = arith.xori %66, %8 : vector<8x512xi32>
    %c64_i32_18 = arith.constant 64 : i32
    %68 = vector.broadcast %c64_i32_18 : i32 to vector<8x512xi32>
    %69 = arith.cmpi slt, %67, %68 : vector<8x512xi32>
    %cst_19 = arith.constant 0x7F800000 : f32
    %70 = vector.broadcast %cst_19 : f32 to vector<8x512xf32>
    %71 = arith.select %69, %65, %70 : vector<8x512xi1>, vector<8x512xf32>
    %72 = arith.cmpf olt, %71, %63 : vector<8x512xf32>
    %73 = arith.cmpf oeq, %71, %63 : vector<8x512xf32>
    %74 = arith.cmpi slt, %66, %64 : vector<8x512xi32>
    %75 = arith.andi %73, %74 : vector<8x512xi1>
    %76 = arith.ori %72, %75 : vector<8x512xi1>
    %77 = arith.select %76, %71, %63 : vector<8x512xi1>, vector<8x512xf32>
    %78 = arith.select %76, %66, %64 : vector<8x512xi1>, vector<8x512xi32>
    %c508_i32 = arith.constant 508 : i32
    %79 = tpu.dynamic_rotate %77 by %c508_i32 dim 1 : vector<8x512xf32>, i32 -> vector<8x512xf32>
    %c508_i32_20 = arith.constant 508 : i32
    %80 = tpu.dynamic_rotate %78 by %c508_i32_20 dim 1 : vector<8x512xi32>, i32 -> vector<8x512xi32>
    %81 = arith.xori %80, %8 : vector<8x512xi32>
    %c64_i32_21 = arith.constant 64 : i32
    %82 = vector.broadcast %c64_i32_21 : i32 to vector<8x512xi32>
    %83 = arith.cmpi slt, %81, %82 : vector<8x512xi32>
    %cst_22 = arith.constant 0x7F800000 : f32
    %84 = vector.broadcast %cst_22 : f32 to vector<8x512xf32>
    %85 = arith.select %83, %79, %84 : vector<8x512xi1>, vector<8x512xf32>
    %86 = arith.cmpf olt, %85, %77 : vector<8x512xf32>
    %87 = arith.cmpf oeq, %85, %77 : vector<8x512xf32>
    %88 = arith.cmpi slt, %80, %78 : vector<8x512xi32>
    %89 = arith.andi %87, %88 : vector<8x512xi1>
    %90 = arith.ori %86, %89 : vector<8x512xi1>
    %91 = arith.select %90, %85, %77 : vector<8x512xi1>, vector<8x512xf32>
    %92 = arith.select %90, %80, %78 : vector<8x512xi1>, vector<8x512xi32>
    %c8_i32 = arith.constant 8 : i32
    %93 = tpu.dynamic_rotate %91 by %c8_i32 dim 1 : vector<8x512xf32>, i32 -> vector<8x512xf32>
    %c8_i32_23 = arith.constant 8 : i32
    %94 = tpu.dynamic_rotate %92 by %c8_i32_23 dim 1 : vector<8x512xi32>, i32 -> vector<8x512xi32>
    %95 = arith.xori %94, %8 : vector<8x512xi32>
    %c64_i32_24 = arith.constant 64 : i32
    %96 = vector.broadcast %c64_i32_24 : i32 to vector<8x512xi32>
    %97 = arith.cmpi slt, %95, %96 : vector<8x512xi32>
    %cst_25 = arith.constant 0x7F800000 : f32
    %98 = vector.broadcast %cst_25 : f32 to vector<8x512xf32>
    %99 = arith.select %97, %93, %98 : vector<8x512xi1>, vector<8x512xf32>
    %100 = arith.cmpf olt, %99, %91 : vector<8x512xf32>
    %101 = arith.cmpf oeq, %99, %91 : vector<8x512xf32>
    %102 = arith.cmpi slt, %94, %92 : vector<8x512xi32>
    %103 = arith.andi %101, %102 : vector<8x512xi1>
    %104 = arith.ori %100, %103 : vector<8x512xi1>
    %105 = arith.select %104, %99, %91 : vector<8x512xi1>, vector<8x512xf32>
    %106 = arith.select %104, %94, %92 : vector<8x512xi1>, vector<8x512xi32>
    %c504_i32 = arith.constant 504 : i32
    %107 = tpu.dynamic_rotate %105 by %c504_i32 dim 1 : vector<8x512xf32>, i32 -> vector<8x512xf32>
    %c504_i32_26 = arith.constant 504 : i32
    %108 = tpu.dynamic_rotate %106 by %c504_i32_26 dim 1 : vector<8x512xi32>, i32 -> vector<8x512xi32>
    %109 = arith.xori %108, %8 : vector<8x512xi32>
    %c64_i32_27 = arith.constant 64 : i32
    %110 = vector.broadcast %c64_i32_27 : i32 to vector<8x512xi32>
    %111 = arith.cmpi slt, %109, %110 : vector<8x512xi32>
    %cst_28 = arith.constant 0x7F800000 : f32
    %112 = vector.broadcast %cst_28 : f32 to vector<8x512xf32>
    %113 = arith.select %111, %107, %112 : vector<8x512xi1>, vector<8x512xf32>
    %114 = arith.cmpf olt, %113, %105 : vector<8x512xf32>
    %115 = arith.cmpf oeq, %113, %105 : vector<8x512xf32>
    %116 = arith.cmpi slt, %108, %106 : vector<8x512xi32>
    %117 = arith.andi %115, %116 : vector<8x512xi1>
    %118 = arith.ori %114, %117 : vector<8x512xi1>
    %119 = arith.select %118, %113, %105 : vector<8x512xi1>, vector<8x512xf32>
    %120 = arith.select %118, %108, %106 : vector<8x512xi1>, vector<8x512xi32>
    %c16_i32 = arith.constant 16 : i32
    %121 = tpu.dynamic_rotate %119 by %c16_i32 dim 1 : vector<8x512xf32>, i32 -> vector<8x512xf32>
    %c16_i32_29 = arith.constant 16 : i32
    %122 = tpu.dynamic_rotate %120 by %c16_i32_29 dim 1 : vector<8x512xi32>, i32 -> vector<8x512xi32>
    %123 = arith.xori %122, %8 : vector<8x512xi32>
    %c64_i32_30 = arith.constant 64 : i32
    %124 = vector.broadcast %c64_i32_30 : i32 to vector<8x512xi32>
    %125 = arith.cmpi slt, %123, %124 : vector<8x512xi32>
    %cst_31 = arith.constant 0x7F800000 : f32
    %126 = vector.broadcast %cst_31 : f32 to vector<8x512xf32>
    %127 = arith.select %125, %121, %126 : vector<8x512xi1>, vector<8x512xf32>
    %128 = arith.cmpf olt, %127, %119 : vector<8x512xf32>
    %129 = arith.cmpf oeq, %127, %119 : vector<8x512xf32>
    %130 = arith.cmpi slt, %122, %120 : vector<8x512xi32>
    %131 = arith.andi %129, %130 : vector<8x512xi1>
    %132 = arith.ori %128, %131 : vector<8x512xi1>
    %133 = arith.select %132, %127, %119 : vector<8x512xi1>, vector<8x512xf32>
    %134 = arith.select %132, %122, %120 : vector<8x512xi1>, vector<8x512xi32>
    %c496_i32 = arith.constant 496 : i32
    %135 = tpu.dynamic_rotate %133 by %c496_i32 dim 1 : vector<8x512xf32>, i32 -> vector<8x512xf32>
    %c496_i32_32 = arith.constant 496 : i32
    %136 = tpu.dynamic_rotate %134 by %c496_i32_32 dim 1 : vector<8x512xi32>, i32 -> vector<8x512xi32>
    %137 = arith.xori %136, %8 : vector<8x512xi32>
    %c64_i32_33 = arith.constant 64 : i32
    %138 = vector.broadcast %c64_i32_33 : i32 to vector<8x512xi32>
    %139 = arith.cmpi slt, %137, %138 : vector<8x512xi32>
    %cst_34 = arith.constant 0x7F800000 : f32
    %140 = vector.broadcast %cst_34 : f32 to vector<8x512xf32>
    %141 = arith.select %139, %135, %140 : vector<8x512xi1>, vector<8x512xf32>
    %142 = arith.cmpf olt, %141, %133 : vector<8x512xf32>
    %143 = arith.cmpf oeq, %141, %133 : vector<8x512xf32>
    %144 = arith.cmpi slt, %136, %134 : vector<8x512xi32>
    %145 = arith.andi %143, %144 : vector<8x512xi1>
    %146 = arith.ori %142, %145 : vector<8x512xi1>
    %147 = arith.select %146, %141, %133 : vector<8x512xi1>, vector<8x512xf32>
    %148 = arith.select %146, %136, %134 : vector<8x512xi1>, vector<8x512xi32>
    %c32_i32 = arith.constant 32 : i32
    %149 = tpu.dynamic_rotate %147 by %c32_i32 dim 1 : vector<8x512xf32>, i32 -> vector<8x512xf32>
    %c32_i32_35 = arith.constant 32 : i32
    %150 = tpu.dynamic_rotate %148 by %c32_i32_35 dim 1 : vector<8x512xi32>, i32 -> vector<8x512xi32>
    %151 = arith.xori %150, %8 : vector<8x512xi32>
    %c64_i32_36 = arith.constant 64 : i32
    %152 = vector.broadcast %c64_i32_36 : i32 to vector<8x512xi32>
    %153 = arith.cmpi slt, %151, %152 : vector<8x512xi32>
    %cst_37 = arith.constant 0x7F800000 : f32
    %154 = vector.broadcast %cst_37 : f32 to vector<8x512xf32>
    %155 = arith.select %153, %149, %154 : vector<8x512xi1>, vector<8x512xf32>
    %156 = arith.cmpf olt, %155, %147 : vector<8x512xf32>
    %157 = arith.cmpf oeq, %155, %147 : vector<8x512xf32>
    %158 = arith.cmpi slt, %150, %148 : vector<8x512xi32>
    %159 = arith.andi %157, %158 : vector<8x512xi1>
    %160 = arith.ori %156, %159 : vector<8x512xi1>
    %161 = arith.select %160, %155, %147 : vector<8x512xi1>, vector<8x512xf32>
    %162 = arith.select %160, %150, %148 : vector<8x512xi1>, vector<8x512xi32>
    %c480_i32 = arith.constant 480 : i32
    %163 = tpu.dynamic_rotate %161 by %c480_i32 dim 1 : vector<8x512xf32>, i32 -> vector<8x512xf32>
    %c480_i32_38 = arith.constant 480 : i32
    %164 = tpu.dynamic_rotate %162 by %c480_i32_38 dim 1 : vector<8x512xi32>, i32 -> vector<8x512xi32>
    %165 = arith.xori %164, %8 : vector<8x512xi32>
    %c64_i32_39 = arith.constant 64 : i32
    %166 = vector.broadcast %c64_i32_39 : i32 to vector<8x512xi32>
    %167 = arith.cmpi slt, %165, %166 : vector<8x512xi32>
    %cst_40 = arith.constant 0x7F800000 : f32
    %168 = vector.broadcast %cst_40 : f32 to vector<8x512xf32>
    %169 = arith.select %167, %163, %168 : vector<8x512xi1>, vector<8x512xf32>
    %170 = arith.cmpf olt, %169, %161 : vector<8x512xf32>
    %171 = arith.cmpf oeq, %169, %161 : vector<8x512xf32>
    %172 = arith.cmpi slt, %164, %162 : vector<8x512xi32>
    %173 = arith.andi %171, %172 : vector<8x512xi1>
    %174 = arith.ori %170, %173 : vector<8x512xi1>
    %175 = arith.select %174, %164, %162 : vector<8x512xi1>, vector<8x512xi32>
    %176 = arith.cmpi eq, %175, %8 : vector<8x512xi32>
    %177 = arith.extui %176 : vector<8x512xi1> to vector<8x512xi32>
    %178 = arith.sitofp %177 : vector<8x512xi32> to vector<8x512xf32>
    %cst_41 = arith.constant dense<0.000000e+00> : vector<8x128xf32>
    %179 = tpu.matmul %178, %1, %cst_41 {dimension_numbers = #tpu.dot_dimension_numbers<[1], [0], [0], [1], [0, 0, 1, 1], [], []>} : vector<8x512xf32>, vector<512x128xf32>, vector<8x128xf32> -> vector<8x128xf32>
    %c0_42 = arith.constant 0 : index
    %c0_43 = arith.constant 0 : index
    %180 = vector.load %arg4[%c0_42, %c0_43] : memref<8x128xf32, #tpu.memory_space<vmem>>, vector<8x128xf32>
    tpu.vector_store %arg4[%c0_42, %c0_43], %179 {strides = array<i32>} : memref<8x128xf32, #tpu.memory_space<vmem>>, vector<8x128xf32>,
    %181 = arith.subf %179, %0 : vector<8x128xf32>
    %182 = arith.mulf %181, %181 : vector<8x128xf32>
    %cst_44 = arith.constant dense<0.000000e+00> : vector<8xf32>
    %183 = vector.multi_reduction <add>, %182, %cst_44 [1] : vector<8x128xf32> to vector<8xf32>
    %184 = vector.shape_cast %183 : vector<8xf32> to vector<8x1xf32>
    %c0_45 = arith.constant 0 : index
    %c0_46 = arith.constant 0 : index
    %185 = vector.load %arg5[%c0_45, %c0_46] : memref<8x1xf32, #tpu.memory_space<vmem>>, vector<8x1xf32>
    tpu.vector_store %arg5[%c0_45, %c0_46], %184 {strides = array<i32>} : memref<8x1xf32, #tpu.memory_space<vmem>>, vector<8x1xf32>,
    return
  }
  func.func @transform_0(%arg0: i32) -> (i32, i32) {
    %c0_i32 = arith.constant 0 : i32
    %c0_i32_0 = arith.constant 0 : i32
    return %arg0, %c0_i32 : i32, i32
  }
  func.func @transform_1(%arg0: i32) -> (i32, i32) {
    %c0_i32 = arith.constant 0 : i32
    %c0_i32_0 = arith.constant 0 : i32
    %c0_i32_1 = arith.constant 0 : i32
    return %c0_i32, %c0_i32_0 : i32, i32
  }
  func.func @transform_2(%arg0: i32) -> (i32, i32) {
    %c0_i32 = arith.constant 0 : i32
    %c0_i32_0 = arith.constant 0 : i32
    %c0_i32_1 = arith.constant 0 : i32
    return %c0_i32, %c0_i32_0 : i32, i32
  }
  func.func @transform_3(%arg0: i32) -> (i32, i32) {
    %c0_i32 = arith.constant 0 : i32
    %c0_i32_0 = arith.constant 0 : i32
    return %arg0, %c0_i32 : i32, i32
  }
  func.func @transform_4(%arg0: i32) -> (i32, i32) {
    %c0_i32 = arith.constant 0 : i32
    %c0_i32_0 = arith.constant 0 : i32
    return %arg0, %c0_i32 : i32, i32
  }
}

module attributes {stable_mosaic.version = 11 : i64} {
  func.func @_sim_kernel(%arg0: i32, %arg1: i32, %arg2: memref<8x128xbf16, #tpu.memory_space<vmem>>, %arg3: memref<128x128xbf16, #tpu.memory_space<vmem>>, %arg4: memref<8x128xf32, #tpu.memory_space<vmem>>) attributes {dimension_semantics = [#tpu.dimension_semantics<parallel>, #tpu.dimension_semantics<parallel>], iteration_bounds = array<i64: 1, 1>, scalar_prefetch = 0 : i64, scratch_operands = 0 : i64, tpu.core_type = #tpu.core_type<tc>, window_params = [{transform_indices = @transform_0, window_bounds = array<i64: 8, 128>}, {transform_indices = @transform_1, window_bounds = array<i64: 128, 128>}, {transform_indices = @transform_2, window_bounds = array<i64: 8, 128>}]} {
    %c0 = arith.constant 0 : index
    %c0_0 = arith.constant 0 : index
    %0 = vector.load %arg2[%c0, %c0_0] : memref<8x128xbf16, #tpu.memory_space<vmem>>, vector<8x128xbf16>
    %c0_1 = arith.constant 0 : index
    %c0_2 = arith.constant 0 : index
    %1 = vector.load %arg3[%c0_1, %c0_2] : memref<128x128xbf16, #tpu.memory_space<vmem>>, vector<128x128xbf16>
    %cst = arith.constant dense<0.000000e+00> : vector<8x128xf32>
    %2 = tpu.matmul %0, %1, %cst {dimension_numbers = #tpu.dot_dimension_numbers<[1], [1], [0], [0], [0, 0, 1, 0], [], []>} : vector<8x128xbf16>, vector<128x128xbf16>, vector<8x128xf32> -> vector<8x128xf32>
    %cst_3 = arith.constant 1.000000e+02 : f32
    %3 = vector.broadcast %cst_3 : f32 to vector<8x128xf32>
    %4 = arith.mulf %3, %2 : vector<8x128xf32>
    %c0_4 = arith.constant 0 : index
    %c0_5 = arith.constant 0 : index
    %5 = vector.load %arg4[%c0_4, %c0_5] : memref<8x128xf32, #tpu.memory_space<vmem>>, vector<8x128xf32>
    tpu.vector_store %arg4[%c0_4, %c0_5], %4 {strides = array<i32>} : memref<8x128xf32, #tpu.memory_space<vmem>>, vector<8x128xf32>,
    return
  }
  func.func @transform_0(%arg0: i32, %arg1: i32) -> (i32, i32) {
    %c0_i32 = arith.constant 0 : i32
    %c0_i32_0 = arith.constant 0 : i32
    return %arg0, %c0_i32 : i32, i32
  }
  func.func @transform_1(%arg0: i32, %arg1: i32) -> (i32, i32) {
    %c0_i32 = arith.constant 0 : i32
    %c0_i32_0 = arith.constant 0 : i32
    return %arg1, %c0_i32 : i32, i32
  }
  func.func @transform_2(%arg0: i32, %arg1: i32) -> (i32, i32) {
    %c0_i32 = arith.constant 0 : i32
    return %arg0, %arg1 : i32, i32
  }
}

</mosaic_0001>

<llo_original>
// kernel: clip_quantized_forward.3
$region0: #{clip_quantized_forward.3}
  #allocation0 [shape = 'u32[]', space=smem, size = 0x4, offset = 0x4, fixed_abs, tag = 'smem constant byte address 0x4 - core index']
  #allocation1 [shape = 'u32[144,128]{1,0:T(1,128)}', space=vmem, size = 0x12000, scoped, tag = 'internal scratch']
  %s0 = inlined_call_operand.vmem [shape: bf16[8,128], index: 0, kind: input, shape index: {}]
  %s1 = inlined_call_operand.vmem [shape: bf16[128,128], index: 1, kind: input, shape index: {}]
  %s2 = inlined_call_operand.vmem [shape: f32[8,128], index: 2, kind: output, shape index: {}]
  %s3 = sld [smem:[#allocation0]]
  $region18: #{clip_quantized_forward.3} parent=0
    _
  %s5 = ssub.s32 1, %s3
  %s6 = scalar_select 0, %s5, %s3
  // Predicated region
  $region2: #{clip_quantized_forward.3} parent=0 // pred_check
    _
  $region3: #{clip_quantized_forward.3} parent=0 // pred_check_branch
    %8 = sbr.rel (0) target = $region5
  $region4: #{clip_quantized_forward.3} parent=0 // pred_region
    _
  $region5: #{clip_quantized_forward.3} parent=0 // pred_fallthru
    _
  // Predicated region
  $region6: #{clip_quantized_forward.3} parent=0 // pred_check
    _
  $region7: #{clip_quantized_forward.3} parent=0 // pred_check_branch
    %10 = sbr.rel (0) target = $region9
  $region8: #{clip_quantized_forward.3} parent=0 // pred_region
    _
  $region9: #{clip_quantized_forward.3} parent=0 // pred_fallthru
    _
  %v12 = vld [vmem:[%s0] sm:$0xf]
  %v13 = vld [vmem:[%s1] sm:$0xf]
  %v14 = vld [vmem:[%s1 + $0x4] sm:$0xf]
  %v15 = vld [vmem:[%s1 + $0x8] sm:$0xf]
  %v16 = vld [vmem:[%s1 + $0xc] sm:$0xf]
  %v17 = vld [vmem:[%s1 + $0x10] sm:$0xf]
  %v18 = vld [vmem:[%s1 + $0x14] sm:$0xf]
  %v19 = vld [vmem:[%s1 + $0x18] sm:$0xf]
  %v20 = vld [vmem:[%s1 + $0x1c] sm:$0xf]
  %v21 = vld [vmem:[%s1 + $0x20] sm:$0xf]
  %v22 = vld [vmem:[%s1 + $0x24] sm:$0xf]
  %v23 = vld [vmem:[%s1 + $0x28] sm:$0xf]
  %v24 = vld [vmem:[%s1 + $0x2c] sm:$0xf]
  %v25 = vld [vmem:[%s1 + $0x30] sm:$0xf]
  %v26 = vld [vmem:[%s1 + $0x34] sm:$0xf]
  %v27 = vld [vmem:[%s1 + $0x38] sm:$0xf]
  %v28 = vld [vmem:[%s1 + $0x3c] sm:$0xf]
  %v45 = vunpack.c.l.b16 %v13
  %v46 = vunpack.c.l.b16 %v14
  %v47 = vunpack.c.l.b16 %v15
  %v48 = vunpack.c.l.b16 %v16
  %v49 = vunpack.c.l.b16 %v17
  %v50 = vunpack.c.l.b16 %v18
  %v51 = vunpack.c.l.b16 %v19
  %v52 = vunpack.c.l.b16 %v20
  %v53 = vunpack.c.l.b16 %v21
  %v54 = vunpack.c.l.b16 %v22
  %v55 = vunpack.c.l.b16 %v23
  %v56 = vunpack.c.l.b16 %v24
  %v57 = vunpack.c.l.b16 %v25
  %v58 = vunpack.c.l.b16 %v26
  %v59 = vunpack.c.l.b16 %v27
  %v60 = vunpack.c.l.b16 %v28
  %v61 = vpack.c.b16 %v46, %v45
  %v62 = vpack.c.b16 %v48, %v47
  %v63 = vpack.c.b16 %v50, %v49
  %v64 = vpack.c.b16 %v52, %v51
  %v65 = vpack.c.b16 %v54, %v53
  %v66 = vpack.c.b16 %v56, %v55
  %v67 = vpack.c.b16 %v58, %v57
  %v68 = vpack.c.b16 %v60, %v59
  %77 = vmatprep.subr.bf16.mxu0 0
  %78 = vmatpush1.bf16.xpose.msra.mxu0 %v61
  %79 = vmatprep.subr.bf16.mxu0 0
  %80 = vmatpush1.bf16.xpose.msra.mxu0 %v62
  %81 = vmatprep.subr.bf16.mxu0 0
  %82 = vmatpush1.bf16.xpose.msra.mxu0 %v63
  %83 = vmatprep.subr.bf16.mxu0 0
  %84 = vmatpush1.bf16.xpose.msra.mxu0 %v64
  %85 = vmatprep.subr.bf16.mxu0 0
  %86 = vmatpush1.bf16.xpose.msra.mxu0 %v65
  %87 = vmatprep.subr.bf16.mxu0 0
  %88 = vmatpush1.bf16.xpose.msra.mxu0 %v66
  %89 = vmatprep.subr.bf16.mxu0 0
  %90 = vmatpush1.bf16.xpose.msra.mxu0 %v67
  %91 = vmatprep.subr.bf16.mxu0 0
  %92 = vmatpush1.bf16.xpose.msra.mxu0 %v68
  %93 = vmatprep.subr.bf16.mxu0 0
  %94 = vmatpush1.bf16.xpose.msra.mxu0 0
  %95 = vmatprep.subr.bf16.mxu0 0
  %96 = vmatpush1.bf16.xpose.msra.mxu0 0
  %97 = vmatprep.subr.bf16.mxu0 0
  %98 = vmatpush1.bf16.xpose.msra.mxu0 0
  %99 = vmatprep.subr.bf16.mxu0 0
  %100 = vmatpush1.bf16.xpose.msra.mxu0 0
  %101 = vmatprep.subr.bf16.mxu0 0
  %102 = vmatpush1.bf16.xpose.msra.mxu0 0
  %103 = vmatprep.subr.bf16.mxu0 0
  %104 = vmatpush1.bf16.xpose.msra.mxu0 0
  %105 = vmatprep.subr.bf16.mxu0 0
  %106 = vmatpush1.bf16.xpose.msra.mxu0 0
  %107 = vmatprep.subr.bf16.mxu0 0
  %108 = vmatpush1.bf16.xpose.msra.mxu0 0
  %109 = vmatprep.mubr.bf16.mxu0 0
  %110 = vmatmul.mubr.bf16.gmra.mrb[0].mxu0 %v12
  %v111 = vpop.f32.mrb[0].mxu0
  %v112 = vadd.f32 0.0, %v111
  %v113 = vpop.f32.mrb[0].mxu0
  %v114 = vpop.f32.mrb[0].mxu0
  %v115 = vpop.f32.mrb[0].mxu0
  %116 = vdwg.mxu0
  %v117 = vmul.f32 %v112, 100.0
  %118 = vst [vmem:[%s2] sm:$0xff] %v117
  // Predicated region
  $region10: #{clip_quantized_forward.3} parent=0 // pred_check
    _
  $region11: #{clip_quantized_forward.3} parent=0 // pred_check_branch
    %120 = sbr.rel (0) target = $region13
  $region12: #{clip_quantized_forward.3} parent=0 // pred_region
    _
  $region13: #{clip_quantized_forward.3} parent=0 // pred_fallthru
    _
  // Predicated region
  $region14: #{clip_quantized_forward.3} parent=0 // pred_check
    _
  $region15: #{clip_quantized_forward.3} parent=0 // pred_check_branch
    %122 = sbr.rel (0) target = $region17
  $region16: #{clip_quantized_forward.3} parent=0 // pred_region
    _
  $region17: #{clip_quantized_forward.3} parent=0 // pred_fallthru
    _

// kernel: clip_quantized_forward.2
$region0: #{clip_quantized_forward.2}
  #allocation0 [shape = 'u32[]', space=smem, size = 0x4, offset = 0x4, fixed_abs, tag = 'smem constant byte address 0x4 - core index']
  #allocation1 [shape = 'u32[144,128]{1,0:T(1,128)}', space=vmem, size = 0x12000, scoped, tag = 'internal scratch']
  %s0 = inlined_call_operand.vmem [shape: f32[8,128], index: 0, kind: input, shape index: {}]
  %s1 = inlined_call_operand.vmem [shape: f32[512,128], index: 1, kind: input, shape index: {}]
  %s2 = inlined_call_operand.vmem [shape: f32[1,512], index: 2, kind: input, shape index: {}]
  %s3 = inlined_call_operand.vmem [shape: f32[8,128], index: 3, kind: output, shape index: {0}]
  %s4 = inlined_call_operand.vmem [shape: f32[8,1], index: 4, kind: output, shape index: {1}]
  %5 = xla_tuple %s3, %s4
  %s6 = sld [smem:[#allocation0]]
  $region30: #{clip_quantized_forward.2} parent=0
    _
  %s8 = ssub.s32 1, %s6
  %s9 = scalar_select 0, %s8, %s6
  // Predicated region
  $region2: #{clip_quantized_forward.2} parent=0 // pred_check
    _
  $region3: #{clip_quantized_forward.2} parent=0 // pred_check_branch
    %11 = sbr.rel (0) target = $region5
  $region4: #{clip_quantized_forward.2} parent=0 // pred_region
    _
  $region5: #{clip_quantized_forward.2} parent=0 // pred_fallthru
    _
  // Predicated region
  $region6: #{clip_quantized_forward.2} parent=0 // pred_check
    _
  $region7: #{clip_quantized_forward.2} parent=0 // pred_check_branch
    %13 = sbr.rel (0) target = $region9
  $region8: #{clip_quantized_forward.2} parent=0 // pred_region
    _
  $region9: #{clip_quantized_forward.2} parent=0 // pred_fallthru
    _
  // Predicated region
  $region10: #{clip_quantized_forward.2} parent=0 // pred_check
    _
  $region11: #{clip_quantized_forward.2} parent=0 // pred_check_branch
    %15 = sbr.rel (0) target = $region13
  $region12: #{clip_quantized_forward.2} parent=0 // pred_region
    _
  $region13: #{clip_quantized_forward.2} parent=0 // pred_fallthru
    _
  %v16 = vld [vmem:[%s0] sm:$0xff]
  %v17 = vld [vmem:[%s1] sm:$0xff]
  %v18 = vld [vmem:[%s1 + $0x8] sm:$0xff]
  %v19 = vld [vmem:[%s1 + $0x10] sm:$0xff]
  %v20 = vld [vmem:[%s1 + $0x18] sm:$0xff]
  %v21 = vld [vmem:[%s1 + $0x20] sm:$0xff]
  %v22 = vld [vmem:[%s1 + $0x28] sm:$0xff]
  %v23 = vld [vmem:[%s1 + $0x30] sm:$0xff]
  %v24 = vld [vmem:[%s1 + $0x38] sm:$0xff]
  %v25 = vld [vmem:[%s1 + $0x40] sm:$0xff]
  %v26 = vld [vmem:[%s1 + $0x48] sm:$0xff]
  %v27 = vld [vmem:[%s1 + $0x50] sm:$0xff]
  %v28 = vld [vmem:[%s1 + $0x58] sm:$0xff]
  %v29 = vld [vmem:[%s1 + $0x60] sm:$0xff]
  %v30 = vld [vmem:[%s1 + $0x68] sm:$0xff]
  %v31 = vld [vmem:[%s1 + $0x70] sm:$0xff]
  %v32 = vld [vmem:[%s1 + $0x78] sm:$0xff]
  %v33 = vld [vmem:[%s1 + $0x80] sm:$0xff]
  %v34 = vld [vmem:[%s1 + $0x88] sm:$0xff]
  %v35 = vld [vmem:[%s1 + $0x90] sm:$0xff]
  %v36 = vld [vmem:[%s1 + $0x98] sm:$0xff]
  %v37 = vld [vmem:[%s1 + $0xa0] sm:$0xff]
  %v38 = vld [vmem:[%s1 + $0xa8] sm:$0xff]
  %v39 = vld [vmem:[%s1 + $0xb0] sm:$0xff]
  %v40 = vld [vmem:[%s1 + $0xb8] sm:$0xff]
  %v41 = vld [vmem:[%s1 + $0xc0] sm:$0xff]
  %v42 = vld [vmem:[%s1 + $0xc8] sm:$0xff]
  %v43 = vld [vmem:[%s1 + $0xd0] sm:$0xff]
  %v44 = vld [vmem:[%s1 + $0xd8] sm:$0xff]
  %v45 = vld [vmem:[%s1 + $0xe0] sm:$0xff]
  %v46 = vld [vmem:[%s1 + $0xe8] sm:$0xff]
  %v47 = vld [vmem:[%s1 + $0xf0] sm:$0xff]
  %v48 = vld [vmem:[%s1 + $0xf8] sm:$0xff]
  %v49 = vld [vmem:[%s1 + $0x100] sm:$0xff]
  %v50 = vld [vmem:[%s1 + $0x108] sm:$0xff]
  %v51 = vld [vmem:[%s1 + $0x110] sm:$0xff]
  %v52 = vld [vmem:[%s1 + $0x118] sm:$0xff]
  %v53 = vld [vmem:[%s1 + $0x120] sm:$0xff]
  %v54 = vld [vmem:[%s1 + $0x128] sm:$0xff]
  %v55 = vld [vmem:[%s1 + $0x130] sm:$0xff]
  %v56 = vld [vmem:[%s1 + $0x138] sm:$0xff]
  %v57 = vld [vmem:[%s1 + $0x140] sm:$0xff]
  %v58 = vld [vmem:[%s1 + $0x148] sm:$0xff]
  %v59 = vld [vmem:[%s1 + $0x150] sm:$0xff]
  %v60 = vld [vmem:[%s1 + $0x158] sm:$0xff]
  %v61 = vld [vmem:[%s1 + $0x160] sm:$0xff]
  %v62 = vld [vmem:[%s1 + $0x168] sm:$0xff]
  %v63 = vld [vmem:[%s1 + $0x170] sm:$0xff]
  %v64 = vld [vmem:[%s1 + $0x178] sm:$0xff]
  %v65 = vld [vmem:[%s1 + $0x180] sm:$0xff]
  %v66 = vld [vmem:[%s1 + $0x188] sm:$0xff]
  %v67 = vld [vmem:[%s1 + $0x190] sm:$0xff]
  %v68 = vld [vmem:[%s1 + $0x198] sm:$0xff]
  %v69 = vld [vmem:[%s1 + $0x1a0] sm:$0xff]
  %v70 = vld [vmem:[%s1 + $0x1a8] sm:$0xff]
  %v71 = vld [vmem:[%s1 + $0x1b0] sm:$0xff]
  %v72 = vld [vmem:[%s1 + $0x1b8] sm:$0xff]
  %v73 = vld [vmem:[%s1 + $0x1c0] sm:$0xff]
  %v74 = vld [vmem:[%s1 + $0x1c8] sm:$0xff]
  %v75 = vld [vmem:[%s1 + $0x1d0] sm:$0xff]
  %v76 = vld [vmem:[%s1 + $0x1d8] sm:$0xff]
  %v77 = vld [vmem:[%s1 + $0x1e0] sm:$0xff]
  %v78 = vld [vmem:[%s1 + $0x1e8] sm:$0xff]
  %v79 = vld [vmem:[%s1 + $0x1f0] sm:$0xff]
  %v80 = vld [vmem:[%s1 + $0x1f8] sm:$0xff]
  %81 = vmatprep.subr.mxu0 0.0
  %82 = vmatpush1.xpose.msra.mxu0 %v17
  %83 = vmatprep.subr.mxu0 0.0
  %84 = vmatpush1.xpose.msra.mxu0 %v18
  %85 = vmatprep.subr.mxu0 0.0
  %86 = vmatpush1.xpose.msra.mxu0 %v19
  %87 = vmatprep.subr.mxu0 0.0
  %88 = vmatpush1.xpose.msra.mxu0 %v20
  %89 = vmatprep.subr.mxu0 0.0
  %90 = vmatpush1.xpose.msra.mxu0 %v21
  %91 = vmatprep.subr.mxu0 0.0
  %92 = vmatpush1.xpose.msra.mxu0 %v22
  %93 = vmatprep.subr.mxu0 0.0
  %94 = vmatpush1.xpose.msra.mxu0 %v23
  %95 = vmatprep.subr.mxu0 0.0
  %96 = vmatpush1.xpose.msra.mxu0 %v24
  %97 = vmatprep.subr.mxu0 0.0
  %98 = vmatpush1.xpose.msra.mxu0 %v25
  %99 = vmatprep.subr.mxu0 0.0
  %100 = vmatpush1.xpose.msra.mxu0 %v26
  %101 = vmatprep.subr.mxu0 0.0
  %102 = vmatpush1.xpose.msra.mxu0 %v27
  %103 = vmatprep.subr.mxu0 0.0
  %104 = vmatpush1.xpose.msra.mxu0 %v28
  %105 = vmatprep.subr.mxu0 0.0
  %106 = vmatpush1.xpose.msra.mxu0 %v29
  %107 = vmatprep.subr.mxu0 0.0
  %108 = vmatpush1.xpose.msra.mxu0 %v30
  %109 = vmatprep.subr.mxu0 0.0
  %110 = vmatpush1.xpose.msra.mxu0 %v31
  %111 = vmatprep.subr.mxu0 0.0
  %112 = vmatpush1.xpose.msra.mxu0 %v32
  %113 = vmatprep.subr.mxu0 0.0
  %114 = vmatpush1.xpose.msra.mxu0 %v33
  %115 = vmatprep.subr.mxu0 0.0
  %116 = vmatpush1.xpose.msra.mxu0 %v34
  %117 = vmatprep.subr.mxu0 0.0
  %118 = vmatpush1.xpose.msra.mxu0 %v35
  %119 = vmatprep.subr.mxu0 0.0
  %120 = vmatpush1.xpose.msra.mxu0 %v36
  %121 = vmatprep.subr.mxu0 0.0
  %122 = vmatpush1.xpose.msra.mxu0 %v37
  %123 = vmatprep.subr.mxu0 0.0
  %124 = vmatpush1.xpose.msra.mxu0 %v38
  %125 = vmatprep.subr.mxu0 0.0
  %126 = vmatpush1.xpose.msra.mxu0 %v39
  %127 = vmatprep.subr.mxu0 0.0
  %128 = vmatpush1.xpose.msra.mxu0 %v40
  %129 = vmatprep.subr.mxu0 0.0
  %130 = vmatpush1.xpose.msra.mxu0 %v41
  %131 = vmatprep.subr.mxu0 0.0
  %132 = vmatpush1.xpose.msra.mxu0 %v42
  %133 = vmatprep.subr.mxu0 0.0
  %134 = vmatpush1.xpose.msra.mxu0 %v43
  %135 = vmatprep.subr.mxu0 0.0
  %136 = vmatpush1.xpose.msra.mxu0 %v44
  %137 = vmatprep.subr.mxu0 0.0
  %138 = vmatpush1.xpose.msra.mxu0 %v45
  %139 = vmatprep.subr.mxu0 0.0
  %140 = vmatpush1.xpose.msra.mxu0 %v46
  %141 = vmatprep.subr.mxu0 0.0
  %142 = vmatpush1.xpose.msra.mxu0 %v47
  %143 = vmatprep.subr.mxu0 0.0
  %144 = vmatpush1.xpose.msra.mxu0 %v48
  %145 = vmatprep.mubr.f32.mxu0 0.0
  %146 = vmatmul.mubr.f32.gmra.mrb[0].mxu0 %v16
  %v147 = vpop.f32.mrb[0].mxu0
  %v148 = vadd.f32 0.0, %v147
  %v149 = vpop.f32.mrb[0].mxu0
  %v150 = vadd.f32 0.0, %v149
  %151 = vdwg.mxu0
  %152 = vmatprep.subr.mxu0 0.0
  %153 = vmatpush1.xpose.msra.mxu0 %v49
  %154 = vmatprep.subr.mxu0 0.0
  %155 = vmatpush1.xpose.msra.mxu0 %v50
  %156 = vmatprep.subr.mxu0 0.0
  %157 = vmatpush1.xpose.msra.mxu0 %v51
  %158 = vmatprep.subr.mxu0 0.0
  %159 = vmatpush1.xpose.msra.mxu0 %v52
  %160 = vmatprep.subr.mxu0 0.0
  %161 = vmatpush1.xpose.msra.mxu0 %v53
  %162 = vmatprep.subr.mxu0 0.0
  %163 = vmatpush1.xpose.msra.mxu0 %v54
  %164 = vmatprep.subr.mxu0 0.0
  %165 = vmatpush1.xpose.msra.mxu0 %v55
  %166 = vmatprep.subr.mxu0 0.0
  %167 = vmatpush1.xpose.msra.mxu0 %v56
  %168 = vmatprep.subr.mxu0 0.0
  %169 = vmatpush1.xpose.msra.mxu0 %v57
  %170 = vmatprep.subr.mxu0 0.0
  %171 = vmatpush1.xpose.msra.mxu0 %v58
  %172 = vmatprep.subr.mxu0 0.0
  %173 = vmatpush1.xpose.msra.mxu0 %v59
  %174 = vmatprep.subr.mxu0 0.0
  %175 = vmatpush1.xpose.msra.mxu0 %v60
  %176 = vmatprep.subr.mxu0 0.0
  %177 = vmatpush1.xpose.msra.mxu0 %v61
  %178 = vmatprep.subr.mxu0 0.0
  %179 = vmatpush1.xpose.msra.mxu0 %v62
  %180 = vmatprep.subr.mxu0 0.0
  %181 = vmatpush1.xpose.msra.mxu0 %v63
  %182 = vmatprep.subr.mxu0 0.0
  %183 = vmatpush1.xpose.msra.mxu0 %v64
  %184 = vmatprep.subr.mxu0 0.0
  %185 = vmatpush1.xpose.msra.mxu0 %v65
  %186 = vmatprep.subr.mxu0 0.0
  %187 = vmatpush1.xpose.msra.mxu0 %v66
  %188 = vmatprep.subr.mxu0 0.0
  %189 = vmatpush1.xpose.msra.mxu0 %v67
  %190 = vmatprep.subr.mxu0 0.0
  %191 = vmatpush1.xpose.msra.mxu0 %v68
  %192 = vmatprep.subr.mxu0 0.0
  %193 = vmatpush1.xpose.msra.mxu0 %v69
  %194 = vmatprep.subr.mxu0 0.0
  %195 = vmatpush1.xpose.msra.mxu0 %v70
  %196 = vmatprep.subr.mxu0 0.0
  %197 = vmatpush1.xpose.msra.mxu0 %v71
  %198 = vmatprep.subr.mxu0 0.0
  %199 = vmatpush1.xpose.msra.mxu0 %v72
  %200 = vmatprep.subr.mxu0 0.0
  %201 = vmatpush1.xpose.msra.mxu0 %v73
  %202 = vmatprep.subr.mxu0 0.0
  %203 = vmatpush1.xpose.msra.mxu0 %v74
  %204 = vmatprep.subr.mxu0 0.0
  %205 = vmatpush1.xpose.msra.mxu0 %v75
  %206 = vmatprep.subr.mxu0 0.0
  %207 = vmatpush1.xpose.msra.mxu0 %v76
  %208 = vmatprep.subr.mxu0 0.0
  %209 = vmatpush1.xpose.msra.mxu0 %v77
  %210 = vmatprep.subr.mxu0 0.0
  %211 = vmatpush1.xpose.msra.mxu0 %v78
  %212 = vmatprep.subr.mxu0 0.0
  %213 = vmatpush1.xpose.msra.mxu0 %v79
  %214 = vmatprep.subr.mxu0 0.0
  %215 = vmatpush1.xpose.msra.mxu0 %v80
  %216 = vmatprep.mubr.f32.mxu0 0.0
  %217 = vmatmul.mubr.f32.gmra.mrb[0].mxu0 %v16
  %v218 = vpop.f32.mrb[0].mxu0
  %v219 = vadd.f32 0.0, %v218
  %v220 = vpop.f32.mrb[0].mxu0
  %v221 = vadd.f32 0.0, %v220
  %222 = vdwg.mxu0
  %v223 = vld [vmem:[%s2] sm:$0xf]
  %v224 = vmul.f32 %v148, 2.0
  %v225 = vmul.f32 %v150, 2.0
  %v226 = vmul.f32 %v219, 2.0
  %v227 = vmul.f32 %v221, 2.0
  %v229 = vlaneseq
  %v230 = vshrl.u32 %v229, 7
  %v231 = vsub.s32 0, %v230
  %v232 = vrot.slane %v223, %v231
  %v233 = vlaneseq
  %v234 = vshrl.u32 %v233, 7
  %v235 = vsub.s32 1, %v234
  %v236 = vrot.slane %v223, %v235
  %v237 = vlaneseq
  %v238 = vshrl.u32 %v237, 7
  %v239 = vsub.s32 2, %v238
  %v240 = vrot.slane %v223, %v239
  %v241 = vlaneseq
  %v242 = vshrl.u32 %v241, 7
  %v243 = vsub.s32 3, %v242
  %v244 = vrot.slane %v223, %v243
  %v249 = vsub.f32 %v232, %v224
  %v250 = vsub.f32 %v236, %v225
  %v251 = vsub.f32 %v240, %v226
  %v252 = vsub.f32 %v244, %v227
  %v253 = vlaneseq
  %v254 = vand.u32 %v253, 127
  %v255 = vadd.s32 %v254, 128
  %v256 = vadd.s32 %v254, 256
  %v257 = vadd.s32 %v254, 384
  %258 = vrot.lane.b32.xlu0 %v249, 1
  %v259 = vpop.permute.xlu0 %258
  %260 = vrot.lane.b32.xlu0 %v250, 1
  %v261 = vpop.permute.xlu0 %260
  %262 = vrot.lane.b32.xlu0 %v251, 1
  %v263 = vpop.permute.xlu0 %262
  %264 = vrot.lane.b32.xlu0 %v252, 1
  %v265 = vpop.permute.xlu0 %264
  %vm266 = vcmp.lt.s32.totalorder %v254, 1
  %v267 = vsel %vm266, %v263, %v265
  %v268 = vsel %vm266, %v261, %v263
  %v269 = vsel %vm266, %v259, %v261
  %v270 = vsel %vm266, %v265, %v259
  %271 = vrot.lane.b32.xlu0 %v254, 1
  %v272 = vpop.permute.xlu0 %271
  %273 = vrot.lane.b32.xlu0 %v255, 1
  %v274 = vpop.permute.xlu0 %273
  %275 = vrot.lane.b32.xlu0 %v256, 1
  %v276 = vpop.permute.xlu0 %275
  %277 = vrot.lane.b32.xlu0 %v257, 1
  %v278 = vpop.permute.xlu0 %277
  %v279 = vsel %vm266, %v276, %v278
  %v280 = vsel %vm266, %v274, %v276
  %v281 = vsel %vm266, %v272, %v274
  %v282 = vsel %vm266, %v278, %v272
  %v283 = vxor.u32 %v282, %v254
  %v284 = vxor.u32 %v281, %v255
  %v285 = vxor.u32 %v280, %v256
  %v286 = vxor.u32 %v279, %v257
  %vm287 = vcmp.lt.s32.totalorder %v283, 64
  %vm288 = vcmp.lt.s32.totalorder %v284, 64
  %vm289 = vcmp.lt.s32.totalorder %v285, 64
  %vm290 = vcmp.lt.s32.totalorder %v286, 64
  %v291 = vsel %vm287, %v270, inf
  %v292 = vsel %vm288, %v269, inf
  %v293 = vsel %vm289, %v268, inf
  %v294 = vsel %vm290, %v267, inf
  %vm295 = vcmp.lt.f32.partialorder %v291, %v249
  %vm296 = vcmp.lt.f32.partialorder %v292, %v250
  %vm297 = vcmp.lt.f32.partialorder %v293, %v251
  %vm298 = vcmp.lt.f32.partialorder %v294, %v252
  %vm299 = vcmp.eq.f32.partialorder %v291, %v249
  %vm300 = vcmp.eq.f32.partialorder %v292, %v250
  %vm301 = vcmp.eq.f32.partialorder %v293, %v251
  %vm302 = vcmp.eq.f32.partialorder %v294, %v252
  %vm303 = vcmp.lt.s32.totalorder %v282, %v254
  %vm304 = vcmp.lt.s32.totalorder %v281, %v255
  %vm305 = vcmp.lt.s32.totalorder %v280, %v256
  %vm306 = vcmp.lt.s32.totalorder %v279, %v257
  %vm307 = vmand %vm299, %vm303
  %vm308 = vmand %vm300, %vm304
  %vm309 = vmand %vm301, %vm305
  %vm310 = vmand %vm302, %vm306
  %vm311 = vmor %vm295, %vm307
  %vm312 = vmor %vm296, %vm308
  %vm313 = vmor %vm297, %vm309
  %vm314 = vmor %vm298, %vm310
  %v315 = vsel %vm311, %v291, %v249
  %v316 = vsel %vm312, %v292, %v250
  %v317 = vsel %vm313, %v293, %v251
  %v318 = vsel %vm314, %v294, %v252
  %v319 = vsel %vm311, %v282, %v254
  %v320 = vsel %vm312, %v281, %v255
  %v321 = vsel %vm313, %v280, %v256
  %v322 = vsel %vm314, %v279, %v257
  %323 = vrot.lane.b32.xlu0 %v315, 127
  %v324 = vpop.permute.xlu0 %323
  %325 = vrot.lane.b32.xlu0 %v316, 127
  %v326 = vpop.permute.xlu0 %325
  %327 = vrot.lane.b32.xlu0 %v317, 127
  %v328 = vpop.permute.xlu0 %327
  %329 = vrot.lane.b32.xlu0 %v318, 127
  %v330 = vpop.permute.xlu0 %329
  %vm331 = vcmp.lt.s32.totalorder %v254, 127
  %v332 = vsel %vm331, %v328, %v330
  %v333 = vsel %vm331, %v326, %v328
  %v334 = vsel %vm331, %v324, %v326
  %v335 = vsel %vm331, %v330, %v324
  %336 = vrot.lane.b32.xlu0 %v319, 127
  %v337 = vpop.permute.xlu0 %336
  %338 = vrot.lane.b32.xlu0 %v320, 127
  %v339 = vpop.permute.xlu0 %338
  %340 = vrot.lane.b32.xlu0 %v321, 127
  %v341 = vpop.permute.xlu0 %340
  %342 = vrot.lane.b32.xlu0 %v322, 127
  %v343 = vpop.permute.xlu0 %342
  %v344 = vsel %vm331, %v341, %v343
  %v345 = vsel %vm331, %v339, %v341
  %v346 = vsel %vm331, %v337, %v339
  %v347 = vsel %vm331, %v343, %v337
  %v348 = vxor.u32 %v346, %v254
  %v349 = vxor.u32 %v345, %v255
  %v350 = vxor.u32 %v344, %v256
  %v351 = vxor.u32 %v347, %v257
  %vm352 = vcmp.lt.s32.totalorder %v348, 64
  %vm353 = vcmp.lt.s32.totalorder %v349, 64
  %vm354 = vcmp.lt.s32.totalorder %v350, 64
  %vm355 = vcmp.lt.s32.totalorder %v351, 64
  %v356 = vsel %vm352, %v334, inf
  %v357 = vsel %vm353, %v333, inf
  %v358 = vsel %vm354, %v332, inf
  %v359 = vsel %vm355, %v335, inf
  %vm360 = vcmp.lt.f32.partialorder %v356, %v315
  %vm361 = vcmp.lt.f32.partialorder %v357, %v316
  %vm362 = vcmp.lt.f32.partialorder %v358, %v317
  %vm363 = vcmp.lt.f32.partialorder %v359, %v318
  %vm364 = vcmp.eq.f32.partialorder %v356, %v315
  %vm365 = vcmp.eq.f32.partialorder %v357, %v316
  %vm366 = vcmp.eq.f32.partialorder %v358, %v317
  %vm367 = vcmp.eq.f32.partialorder %v359, %v318
  %vm368 = vcmp.lt.s32.totalorder %v346, %v319
  %vm369 = vcmp.lt.s32.totalorder %v345, %v320
  %vm370 = vcmp.lt.s32.totalorder %v344, %v321
  %vm371 = vcmp.lt.s32.totalorder %v347, %v322
  %vm372 = vmand %vm364, %vm368
  %vm373 = vmand %vm365, %vm369
  %vm374 = vmand %vm366, %vm370
  %vm375 = vmand %vm367, %vm371
  %vm376 = vmor %vm360, %vm372
  %vm377 = vmor %vm361, %vm373
  %vm378 = vmor %vm362, %vm374
  %vm379 = vmor %vm363, %vm375
  %v380 = vsel %vm376, %v356, %v315
  %v381 = vsel %vm377, %v357, %v316
  %v382 = vsel %vm378, %v358, %v317
  %v383 = vsel %vm379, %v359, %v318
  %v384 = vsel %vm376, %v346, %v319
  %v385 = vsel %vm377, %v345, %v320
  %v386 = vsel %vm378, %v344, %v321
  %v387 = vsel %vm379, %v347, %v322
  %388 = vrot.lane.b32.xlu0 %v380, 2
  %v389 = vpop.permute.xlu0 %388
  %390 = vrot.lane.b32.xlu0 %v381, 2
  %v391 = vpop.permute.xlu0 %390
  %392 = vrot.lane.b32.xlu0 %v382, 2
  %v393 = vpop.permute.xlu0 %392
  %394 = vrot.lane.b32.xlu0 %v383, 2
  %v395 = vpop.permute.xlu0 %394
  %vm396 = vcmp.lt.s32.totalorder %v254, 2
  %v397 = vsel %vm396, %v393, %v395
  %v398 = vsel %vm396, %v391, %v393
  %v399 = vsel %vm396, %v389, %v391
  %v400 = vsel %vm396, %v395, %v389
  %401 = vrot.lane.b32.xlu0 %v384, 2
  %v402 = vpop.permute.xlu0 %401
  %403 = vrot.lane.b32.xlu0 %v385, 2
  %v404 = vpop.permute.xlu0 %403
  %405 = vrot.lane.b32.xlu0 %v386, 2
  %v406 = vpop.permute.xlu0 %405
  %407 = vrot.lane.b32.xlu0 %v387, 2
  %v408 = vpop.permute.xlu0 %407
  %v409 = vsel %vm396, %v406, %v408
  %v410 = vsel %vm396, %v404, %v406
  %v411 = vsel %vm396, %v402, %v404
  %v412 = vsel %vm396, %v408, %v402
  %v413 = vxor.u32 %v412, %v254
  %v414 = vxor.u32 %v411, %v255
  %v415 = vxor.u32 %v410, %v256
  %v416 = vxor.u32 %v409, %v257
  %vm417 = vcmp.lt.s32.totalorder %v413, 64
  %vm418 = vcmp.lt.s32.totalorder %v414, 64
  %vm419 = vcmp.lt.s32.totalorder %v415, 64
  %vm420 = vcmp.lt.s32.totalorder %v416, 64
  %v421 = vsel %vm417, %v400, inf
  %v422 = vsel %vm418, %v399, inf
  %v423 = vsel %vm419, %v398, inf
  %v424 = vsel %vm420, %v397, inf
  %vm425 = vcmp.lt.f32.partialorder %v421, %v380
  %vm426 = vcmp.lt.f32.partialorder %v422, %v381
  %vm427 = vcmp.lt.f32.partialorder %v423, %v382
  %vm428 = vcmp.lt.f32.partialorder %v424, %v383
  %vm429 = vcmp.eq.f32.partialorder %v421, %v380
  %vm430 = vcmp.eq.f32.partialorder %v422, %v381
  %vm431 = vcmp.eq.f32.partialorder %v423, %v382
  %vm432 = vcmp.eq.f32.partialorder %v424, %v383
  %vm433 = vcmp.lt.s32.totalorder %v412, %v384
  %vm434 = vcmp.lt.s32.totalorder %v411, %v385
  %vm435 = vcmp.lt.s32.totalorder %v410, %v386
  %vm436 = vcmp.lt.s32.totalorder %v409, %v387
  %vm437 = vmand %vm429, %vm433
  %vm438 = vmand %vm430, %vm434
  %vm439 = vmand %vm431, %vm435
  %vm440 = vmand %vm432, %vm436
  %vm441 = vmor %vm425, %vm437
  %vm442 = vmor %vm426, %vm438
  %vm443 = vmor %vm427, %vm439
  %vm444 = vmor %vm428, %vm440
  %v445 = vsel %vm441, %v421, %v380
  %v446 = vsel %vm442, %v422, %v381
  %v447 = vsel %vm443, %v423, %v382
  %v448 = vsel %vm444, %v424, %v383
  %v449 = vsel %vm441, %v412, %v384
  %v450 = vsel %vm442, %v411, %v385
  %v451 = vsel %vm443, %v410, %v386
  %v452 = vsel %vm444, %v409, %v387
  %453 = vrot.lane.b32.xlu0 %v445, 126
  %v454 = vpop.permute.xlu0 %453
  %455 = vrot.lane.b32.xlu0 %v446, 126
  %v456 = vpop.permute.xlu0 %455
  %457 = vrot.lane.b32.xlu0 %v447, 126
  %v458 = vpop.permute.xlu0 %457
  %459 = vrot.lane.b32.xlu0 %v448, 126
  %v460 = vpop.permute.xlu0 %459
  %vm461 = vcmp.lt.s32.totalorder %v254, 126
  %v462 = vsel %vm461, %v458, %v460
  %v463 = vsel %vm461, %v456, %v458
  %v464 = vsel %vm461, %v454, %v456
  %v465 = vsel %vm461, %v460, %v454
  %466 = vrot.lane.b32.xlu0 %v449, 126
  %v467 = vpop.permute.xlu0 %466
  %468 = vrot.lane.b32.xlu0 %v450, 126
  %v469 = vpop.permute.xlu0 %468
  %470 = vrot.lane.b32.xlu0 %v451, 126
  %v471 = vpop.permute.xlu0 %470
  %472 = vrot.lane.b32.xlu0 %v452, 126
  %v473 = vpop.permute.xlu0 %472
  %v474 = vsel %vm461, %v471, %v473
  %v475 = vsel %vm461, %v469, %v471
  %v476 = vsel %vm461, %v467, %v469
  %v477 = vsel %vm461, %v473, %v467
  %v478 = vxor.u32 %v476, %v254
  %v479 = vxor.u32 %v475, %v255
  %v480 = vxor.u32 %v474, %v256
  %v481 = vxor.u32 %v477, %v257
  %vm482 = vcmp.lt.s32.totalorder %v478, 64
  %vm483 = vcmp.lt.s32.totalorder %v479, 64
  %vm484 = vcmp.lt.s32.totalorder %v480, 64
  %vm485 = vcmp.lt.s32.totalorder %v481, 64
  %v486 = vsel %vm482, %v464, inf
  %v487 = vsel %vm483, %v463, inf
  %v488 = vsel %vm484, %v462, inf
  %v489 = vsel %vm485, %v465, inf
  %vm490 = vcmp.lt.f32.partialorder %v486, %v445
  %vm491 = vcmp.lt.f32.partialorder %v487, %v446
  %vm492 = vcmp.lt.f32.partialorder %v488, %v447
  %vm493 = vcmp.lt.f32.partialorder %v489, %v448
  %vm494 = vcmp.eq.f32.partialorder %v486, %v445
  %vm495 = vcmp.eq.f32.partialorder %v487, %v446
  %vm496 = vcmp.eq.f32.partialorder %v488, %v447
  %vm497 = vcmp.eq.f32.partialorder %v489, %v448
  %vm498 = vcmp.lt.s32.totalorder %v476, %v449
  %vm499 = vcmp.lt.s32.totalorder %v475, %v450
  %vm500 = vcmp.lt.s32.totalorder %v474, %v451
  %vm501 = vcmp.lt.s32.totalorder %v477, %v452
  %vm502 = vmand %vm494, %vm498
  %vm503 = vmand %vm495, %vm499
  %vm504 = vmand %vm496, %vm500
  %vm505 = vmand %vm497, %vm501
  %vm506 = vmor %vm490, %vm502
  %vm507 = vmor %vm491, %vm503
  %vm508 = vmor %vm492, %vm504
  %vm509 = vmor %vm493, %vm505
  %v510 = vsel %vm506, %v486, %v445
  %v511 = vsel %vm507, %v487, %v446
  %v512 = vsel %vm508, %v488, %v447
  %v513 = vsel %vm509, %v489, %v448
  %v514 = vsel %vm506, %v476, %v449
  %v515 = vsel %vm507, %v475, %v450
  %v516 = vsel %vm508, %v474, %v451
  %v517 = vsel %vm509, %v477, %v452
  %518 = vrot.lane.b32.xlu0 %v510, 4
  %v519 = vpop.permute.xlu0 %518
  %520 = vrot.lane.b32.xlu0 %v511, 4
  %v521 = vpop.permute.xlu0 %520
  %522 = vrot.lane.b32.xlu0 %v512, 4
  %v523 = vpop.permute.xlu0 %522
  %524 = vrot.lane.b32.xlu0 %v513, 4
  %v525 = vpop.permute.xlu0 %524
  %vm526 = vcmp.lt.s32.totalorder %v254, 4
  %v527 = vsel %vm526, %v523, %v525
  %v528 = vsel %vm526, %v521, %v523
  %v529 = vsel %vm526, %v519, %v521
  %v530 = vsel %vm526, %v525, %v519
  %531 = vrot.lane.b32.xlu0 %v514, 4
  %v532 = vpop.permute.xlu0 %531
  %533 = vrot.lane.b32.xlu0 %v515, 4
  %v534 = vpop.permute.xlu0 %533
  %535 = vrot.lane.b32.xlu0 %v516, 4
  %v536 = vpop.permute.xlu0 %535
  %537 = vrot.lane.b32.xlu0 %v517, 4
  %v538 = vpop.permute.xlu0 %537
  %v539 = vsel %vm526, %v536, %v538
  %v540 = vsel %vm526, %v534, %v536
  %v541 = vsel %vm526, %v532, %v534
  %v542 = vsel %vm526, %v538, %v532
  %v543 = vxor.u32 %v542, %v254
  %v544 = vxor.u32 %v541, %v255
  %v545 = vxor.u32 %v540, %v256
  %v546 = vxor.u32 %v539, %v257
  %vm547 = vcmp.lt.s32.totalorder %v543, 64
  %vm548 = vcmp.lt.s32.totalorder %v544, 64
  %vm549 = vcmp.lt.s32.totalorder %v545, 64
  %vm550 = vcmp.lt.s32.totalorder %v546, 64
  %v551 = vsel %vm547, %v530, inf
  %v552 = vsel %vm548, %v529, inf
  %v553 = vsel %vm549, %v528, inf
  %v554 = vsel %vm550, %v527, inf
  %vm555 = vcmp.lt.f32.partialorder %v551, %v510
  %vm556 = vcmp.lt.f32.partialorder %v552, %v511
  %vm557 = vcmp.lt.f32.partialorder %v553, %v512
  %vm558 = vcmp.lt.f32.partialorder %v554, %v513
  %vm559 = vcmp.eq.f32.partialorder %v551, %v510
  %vm560 = vcmp.eq.f32.partialorder %v552, %v511
  %vm561 = vcmp.eq.f32.partialorder %v553, %v512
  %vm562 = vcmp.eq.f32.partialorder %v554, %v513
  %vm563 = vcmp.lt.s32.totalorder %v542, %v514
  %vm564 = vcmp.lt.s32.totalorder %v541, %v515
  %vm565 = vcmp.lt.s32.totalorder %v540, %v516
  %vm566 = vcmp.lt.s32.totalorder %v539, %v517
  %vm567 = vmand %vm559, %vm563
  %vm568 = vmand %vm560, %vm564
  %vm569 = vmand %vm561, %vm565
  %vm570 = vmand %vm562, %vm566
  %vm571 = vmor %vm555, %vm567
  %vm572 = vmor %vm556, %vm568
  %vm573 = vmor %vm557, %vm569
  %vm574 = vmor %vm558, %vm570
  %v575 = vsel %vm571, %v551, %v510
  %v576 = vsel %vm572, %v552, %v511
  %v577 = vsel %vm573, %v553, %v512
  %v578 = vsel %vm574, %v554, %v513
  %v579 = vsel %vm571, %v542, %v514
  %v580 = vsel %vm572, %v541, %v515
  %v581 = vsel %vm573, %v540, %v516
  %v582 = vsel %vm574, %v539, %v517
  %583 = vrot.lane.b32.xlu0 %v575, 124
  %v584 = vpop.permute.xlu0 %583
  %585 = vrot.lane.b32.xlu0 %v576, 124
  %v586 = vpop.permute.xlu0 %585
  %587 = vrot.lane.b32.xlu0 %v577, 124
  %v588 = vpop.permute.xlu0 %587
  %589 = vrot.lane.b32.xlu0 %v578, 124
  %v590 = vpop.permute.xlu0 %589
  %vm591 = vcmp.lt.s32.totalorder %v254, 124
  %v592 = vsel %vm591, %v588, %v590
  %v593 = vsel %vm591, %v586, %v588
  %v594 = vsel %vm591, %v584, %v586
  %v595 = vsel %vm591, %v590, %v584
  %596 = vrot.lane.b32.xlu0 %v579, 124
  %v597 = vpop.permute.xlu0 %596
  %598 = vrot.lane.b32.xlu0 %v580, 124
  %v599 = vpop.permute.xlu0 %598
  %600 = vrot.lane.b32.xlu0 %v581, 124
  %v601 = vpop.permute.xlu0 %600
  %602 = vrot.lane.b32.xlu0 %v582, 124
  %v603 = vpop.permute.xlu0 %602
  %v604 = vsel %vm591, %v601, %v603
  %v605 = vsel %vm591, %v599, %v601
  %v606 = vsel %vm591, %v597, %v599
  %v607 = vsel %vm591, %v603, %v597
  %v608 = vxor.u32 %v606, %v254
  %v609 = vxor.u32 %v605, %v255
  %v610 = vxor.u32 %v604, %v256
  %v611 = vxor.u32 %v607, %v257
  %vm612 = vcmp.lt.s32.totalorder %v608, 64
  %vm613 = vcmp.lt.s32.totalorder %v609, 64
  %vm614 = vcmp.lt.s32.totalorder %v610, 64
  %vm615 = vcmp.lt.s32.totalorder %v611, 64
  %v616 = vsel %vm612, %v594, inf
  %v617 = vsel %vm613, %v593, inf
  %v618 = vsel %vm614, %v592, inf
  %v619 = vsel %vm615, %v595, inf
  %vm620 = vcmp.lt.f32.partialorder %v616, %v575
  %vm621 = vcmp.lt.f32.partialorder %v617, %v576
  %vm622 = vcmp.lt.f32.partialorder %v618, %v577
  %vm623 = vcmp.lt.f32.partialorder %v619, %v578
  %vm624 = vcmp.eq.f32.partialorder %v616, %v575
  %vm625 = vcmp.eq.f32.partialorder %v617, %v576
  %vm626 = vcmp.eq.f32.partialorder %v618, %v577
  %vm627 = vcmp.eq.f32.partialorder %v619, %v578
  %vm628 = vcmp.lt.s32.totalorder %v606, %v579
  %vm629 = vcmp.lt.s32.totalorder %v605, %v580
  %vm630 = vcmp.lt.s32.totalorder %v604, %v581
  %vm631 = vcmp.lt.s32.totalorder %v607, %v582
  %vm632 = vmand %vm624, %vm628
  %vm633 = vmand %vm625, %vm629
  %vm634 = vmand %vm626, %vm630
  %vm635 = vmand %vm627, %vm631
  %vm636 = vmor %vm620, %vm632
  %vm637 = vmor %vm621, %vm633
  %vm638 = vmor %vm622, %vm634
  %vm639 = vmor %vm623, %vm635
  %v640 = vsel %vm636, %v616, %v575
  %v641 = vsel %vm637, %v617, %v576
  %v642 = vsel %vm638, %v618, %v577
  %v643 = vsel %vm639, %v619, %v578
  %v644 = vsel %vm636, %v606, %v579
  %v645 = vsel %vm637, %v605, %v580
  %v646 = vsel %vm638, %v604, %v581
  %v647 = vsel %vm639, %v607, %v582
  %648 = vrot.lane.b32.xlu0 %v640, 8
  %v649 = vpop.permute.xlu0 %648
  %650 = vrot.lane.b32.xlu0 %v641, 8
  %v651 = vpop.permute.xlu0 %650
  %652 = vrot.lane.b32.xlu0 %v642, 8
  %v653 = vpop.permute.xlu0 %652
  %654 = vrot.lane.b32.xlu0 %v643, 8
  %v655 = vpop.permute.xlu0 %654
  %vm656 = vcmp.lt.s32.totalorder %v254, 8
  %v657 = vsel %vm656, %v653, %v655
  %v658 = vsel %vm656, %v651, %v653
  %v659 = vsel %vm656, %v649, %v651
  %v660 = vsel %vm656, %v655, %v649
  %661 = vrot.lane.b32.xlu0 %v644, 8
  %v662 = vpop.permute.xlu0 %661
  %663 = vrot.lane.b32.xlu0 %v645, 8
  %v664 = vpop.permute.xlu0 %663
  %665 = vrot.lane.b32.xlu0 %v646, 8
  %v666 = vpop.permute.xlu0 %665
  %667 = vrot.lane.b32.xlu0 %v647, 8
  %v668 = vpop.permute.xlu0 %667
  %v669 = vsel %vm656, %v666, %v668
  %v670 = vsel %vm656, %v664, %v666
  %v671 = vsel %vm656, %v662, %v664
  %v672 = vsel %vm656, %v668, %v662
  %v673 = vxor.u32 %v672, %v254
  %v674 = vxor.u32 %v671, %v255
  %v675 = vxor.u32 %v670, %v256
  %v676 = vxor.u32 %v669, %v257
  %vm677 = vcmp.lt.s32.totalorder %v673, 64
  %vm678 = vcmp.lt.s32.totalorder %v674, 64
  %vm679 = vcmp.lt.s32.totalorder %v675, 64
  %vm680 = vcmp.lt.s32.totalorder %v676, 64
  %v681 = vsel %vm677, %v660, inf
  %v682 = vsel %vm678, %v659, inf
  %v683 = vsel %vm679, %v658, inf
  %v684 = vsel %vm680, %v657, inf
  %vm685 = vcmp.lt.f32.partialorder %v681, %v640
  %vm686 = vcmp.lt.f32.partialorder %v682, %v641
  %vm687 = vcmp.lt.f32.partialorder %v683, %v642
  %vm688 = vcmp.lt.f32.partialorder %v684, %v643
  %vm689 = vcmp.eq.f32.partialorder %v681, %v640
  %vm690 = vcmp.eq.f32.partialorder %v682, %v641
  %vm691 = vcmp.eq.f32.partialorder %v683, %v642
  %vm692 = vcmp.eq.f32.partialorder %v684, %v643
  %vm693 = vcmp.lt.s32.totalorder %v672, %v644
  %vm694 = vcmp.lt.s32.totalorder %v671, %v645
  %vm695 = vcmp.lt.s32.totalorder %v670, %v646
  %vm696 = vcmp.lt.s32.totalorder %v669, %v647
  %vm697 = vmand %vm689, %vm693
  %vm698 = vmand %vm690, %vm694
  %vm699 = vmand %vm691, %vm695
  %vm700 = vmand %vm692, %vm696
  %vm701 = vmor %vm685, %vm697
  %vm702 = vmor %vm686, %vm698
  %vm703 = vmor %vm687, %vm699
  %vm704 = vmor %vm688, %vm700
  %v705 = vsel %vm701, %v681, %v640
  %v706 = vsel %vm702, %v682, %v641
  %v707 = vsel %vm703, %v683, %v642
  %v708 = vsel %vm704, %v684, %v643
  %v709 = vsel %vm701, %v672, %v644
  %v710 = vsel %vm702, %v671, %v645
  %v711 = vsel %vm703, %v670, %v646
  %v712 = vsel %vm704, %v669, %v647
  %713 = vrot.lane.b32.xlu0 %v705, 120
  %v714 = vpop.permute.xlu0 %713
  %715 = vrot.lane.b32.xlu0 %v706, 120
  %v716 = vpop.permute.xlu0 %715
  %717 = vrot.lane.b32.xlu0 %v707, 120
  %v718 = vpop.permute.xlu0 %717
  %719 = vrot.lane.b32.xlu0 %v708, 120
  %v720 = vpop.permute.xlu0 %719
  %vm721 = vcmp.lt.s32.totalorder %v254, 120
  %v722 = vsel %vm721, %v718, %v720
  %v723 = vsel %vm721, %v716, %v718
  %v724 = vsel %vm721, %v714, %v716
  %v725 = vsel %vm721, %v720, %v714
  %726 = vrot.lane.b32.xlu0 %v709, 120
  %v727 = vpop.permute.xlu0 %726
  %728 = vrot.lane.b32.xlu0 %v710, 120
  %v729 = vpop.permute.xlu0 %728
  %730 = vrot.lane.b32.xlu0 %v711, 120
  %v731 = vpop.permute.xlu0 %730
  %732 = vrot.lane.b32.xlu0 %v712, 120
  %v733 = vpop.permute.xlu0 %732
  %v734 = vsel %vm721, %v731, %v733
  %v735 = vsel %vm721, %v729, %v731
  %v736 = vsel %vm721, %v727, %v729
  %v737 = vsel %vm721, %v733, %v727
  %v738 = vxor.u32 %v736, %v254
  %v739 = vxor.u32 %v735, %v255
  %v740 = vxor.u32 %v734, %v256
  %v741 = vxor.u32 %v737, %v257
  %vm742 = vcmp.lt.s32.totalorder %v738, 64
  %vm743 = vcmp.lt.s32.totalorder %v739, 64
  %vm744 = vcmp.lt.s32.totalorder %v740, 64
  %vm745 = vcmp.lt.s32.totalorder %v741, 64
  %v746 = vsel %vm742, %v724, inf
  %v747 = vsel %vm743, %v723, inf
  %v748 = vsel %vm744, %v722, inf
  %v749 = vsel %vm745, %v725, inf
  %vm750 = vcmp.lt.f32.partialorder %v746, %v705
  %vm751 = vcmp.lt.f32.partialorder %v747, %v706
  %vm752 = vcmp.lt.f32.partialorder %v748, %v707
  %vm753 = vcmp.lt.f32.partialorder %v749, %v708
  %vm754 = vcmp.eq.f32.partialorder %v746, %v705
  %vm755 = vcmp.eq.f32.partialorder %v747, %v706
  %vm756 = vcmp.eq.f32.partialorder %v748, %v707
  %vm757 = vcmp.eq.f32.partialorder %v749, %v708
  %vm758 = vcmp.lt.s32.totalorder %v736, %v709
  %vm759 = vcmp.lt.s32.totalorder %v735, %v710
  %vm760 = vcmp.lt.s32.totalorder %v734, %v711
  %vm761 = vcmp.lt.s32.totalorder %v737, %v712
  %vm762 = vmand %vm754, %vm758
  %vm763 = vmand %vm755, %vm759
  %vm764 = vmand %vm756, %vm760
  %vm765 = vmand %vm757, %vm761
  %vm766 = vmor %vm750, %vm762
  %vm767 = vmor %vm751, %vm763
  %vm768 = vmor %vm752, %vm764
  %vm769 = vmor %vm753, %vm765
  %v770 = vsel %vm766, %v746, %v705
  %v771 = vsel %vm767, %v747, %v706
  %v772 = vsel %vm768, %v748, %v707
  %v773 = vsel %vm769, %v749, %v708
  %v774 = vsel %vm766, %v736, %v709
  %v775 = vsel %vm767, %v735, %v710
  %v776 = vsel %vm768, %v734, %v711
  %v777 = vsel %vm769, %v737, %v712
  %778 = vrot.lane.b32.xlu0 %v770, 16
  %v779 = vpop.permute.xlu0 %778
  %780 = vrot.lane.b32.xlu0 %v771, 16
  %v781 = vpop.permute.xlu0 %780
  %782 = vrot.lane.b32.xlu0 %v772, 16
  %v783 = vpop.permute.xlu0 %782
  %784 = vrot.lane.b32.xlu0 %v773, 16
  %v785 = vpop.permute.xlu0 %784
  %vm786 = vcmp.lt.s32.totalorder %v254, 16
  %v787 = vsel %vm786, %v783, %v785
  %v788 = vsel %vm786, %v781, %v783
  %v789 = vsel %vm786, %v779, %v781
  %v790 = vsel %vm786, %v785, %v779
  %791 = vrot.lane.b32.xlu0 %v774, 16
  %v792 = vpop.permute.xlu0 %791
  %793 = vrot.lane.b32.xlu0 %v775, 16
  %v794 = vpop.permute.xlu0 %793
  %795 = vrot.lane.b32.xlu0 %v776, 16
  %v796 = vpop.permute.xlu0 %795
  %797 = vrot.lane.b32.xlu0 %v777, 16
  %v798 = vpop.permute.xlu0 %797
  %v799 = vsel %vm786, %v796, %v798
  %v800 = vsel %vm786, %v794, %v796
  %v801 = vsel %vm786, %v792, %v794
  %v802 = vsel %vm786, %v798, %v792
  %v803 = vxor.u32 %v802, %v254
  %v804 = vxor.u32 %v801, %v255
  %v805 = vxor.u32 %v800, %v256
  %v806 = vxor.u32 %v799, %v257
  %vm807 = vcmp.lt.s32.totalorder %v803, 64
  %vm808 = vcmp.lt.s32.totalorder %v804, 64
  %vm809 = vcmp.lt.s32.totalorder %v805, 64
  %vm810 = vcmp.lt.s32.totalorder %v806, 64
  %v811 = vsel %vm807, %v790, inf
  %v812 = vsel %vm808, %v789, inf
  %v813 = vsel %vm809, %v788, inf
  %v814 = vsel %vm810, %v787, inf
  %vm815 = vcmp.lt.f32.partialorder %v811, %v770
  %vm816 = vcmp.lt.f32.partialorder %v812, %v771
  %vm817 = vcmp.lt.f32.partialorder %v813, %v772
  %vm818 = vcmp.lt.f32.partialorder %v814, %v773
  %vm819 = vcmp.eq.f32.partialorder %v811, %v770
  %vm820 = vcmp.eq.f32.partialorder %v812, %v771
  %vm821 = vcmp.eq.f32.partialorder %v813, %v772
  %vm822 = vcmp.eq.f32.partialorder %v814, %v773
  %vm823 = vcmp.lt.s32.totalorder %v802, %v774
  %vm824 = vcmp.lt.s32.totalorder %v801, %v775
  %vm825 = vcmp.lt.s32.totalorder %v800, %v776
  %vm826 = vcmp.lt.s32.totalorder %v799, %v777
  %vm827 = vmand %vm819, %vm823
  %vm828 = vmand %vm820, %vm824
  %vm829 = vmand %vm821, %vm825
  %vm830 = vmand %vm822, %vm826
  %vm831 = vmor %vm815, %vm827
  %vm832 = vmor %vm816, %vm828
  %vm833 = vmor %vm817, %vm829
  %vm834 = vmor %vm818, %vm830
  %v835 = vsel %vm831, %v811, %v770
  %v836 = vsel %vm832, %v812, %v771
  %v837 = vsel %vm833, %v813, %v772
  %v838 = vsel %vm834, %v814, %v773
  %v839 = vsel %vm831, %v802, %v774
  %v840 = vsel %vm832, %v801, %v775
  %v841 = vsel %vm833, %v800, %v776
  %v842 = vsel %vm834, %v799, %v777
  %843 = vrot.lane.b32.xlu0 %v835, 112
  %v844 = vpop.permute.xlu0 %843
  %845 = vrot.lane.b32.xlu0 %v836, 112
  %v846 = vpop.permute.xlu0 %845
  %847 = vrot.lane.b32.xlu0 %v837, 112
  %v848 = vpop.permute.xlu0 %847
  %849 = vrot.lane.b32.xlu0 %v838, 112
  %v850 = vpop.permute.xlu0 %849
  %vm851 = vcmp.lt.s32.totalorder %v254, 112
  %v852 = vsel %vm851, %v848, %v850
  %v853 = vsel %vm851, %v846, %v848
  %v854 = vsel %vm851, %v844, %v846
  %v855 = vsel %vm851, %v850, %v844
  %856 = vrot.lane.b32.xlu0 %v839, 112
  %v857 = vpop.permute.xlu0 %856
  %858 = vrot.lane.b32.xlu0 %v840, 112
  %v859 = vpop.permute.xlu0 %858
  %860 = vrot.lane.b32.xlu0 %v841, 112
  %v861 = vpop.permute.xlu0 %860
  %862 = vrot.lane.b32.xlu0 %v842, 112
  %v863 = vpop.permute.xlu0 %862
  %v864 = vsel %vm851, %v861, %v863
  %v865 = vsel %vm851, %v859, %v861
  %v866 = vsel %vm851, %v857, %v859
  %v867 = vsel %vm851, %v863, %v857
  %v868 = vxor.u32 %v866, %v254
  %v869 = vxor.u32 %v865, %v255
  %v870 = vxor.u32 %v864, %v256
  %v871 = vxor.u32 %v867, %v257
  %vm872 = vcmp.lt.s32.totalorder %v868, 64
  %vm873 = vcmp.lt.s32.totalorder %v869, 64
  %vm874 = vcmp.lt.s32.totalorder %v870, 64
  %vm875 = vcmp.lt.s32.totalorder %v871, 64
  %v876 = vsel %vm872, %v854, inf
  %v877 = vsel %vm873, %v853, inf
  %v878 = vsel %vm874, %v852, inf
  %v879 = vsel %vm875, %v855, inf
  %vm880 = vcmp.lt.f32.partialorder %v876, %v835
  %vm881 = vcmp.lt.f32.partialorder %v877, %v836
  %vm882 = vcmp.lt.f32.partialorder %v878, %v837
  %vm883 = vcmp.lt.f32.partialorder %v879, %v838
  %vm884 = vcmp.eq.f32.partialorder %v876, %v835
  %vm885 = vcmp.eq.f32.partialorder %v877, %v836
  %vm886 = vcmp.eq.f32.partialorder %v878, %v837
  %vm887 = vcmp.eq.f32.partialorder %v879, %v838
  %vm888 = vcmp.lt.s32.totalorder %v866, %v839
  %vm889 = vcmp.lt.s32.totalorder %v865, %v840
  %vm890 = vcmp.lt.s32.totalorder %v864, %v841
  %vm891 = vcmp.lt.s32.totalorder %v867, %v842
  %vm892 = vmand %vm884, %vm888
  %vm893 = vmand %vm885, %vm889
  %vm894 = vmand %vm886, %vm890
  %vm895 = vmand %vm887, %vm891
  %vm896 = vmor %vm880, %vm892
  %vm897 = vmor %vm881, %vm893
  %vm898 = vmor %vm882, %vm894
  %vm899 = vmor %vm883, %vm895
  %v900 = vsel %vm896, %v876, %v835
  %v901 = vsel %vm897, %v877, %v836
  %v902 = vsel %vm898, %v878, %v837
  %v903 = vsel %vm899, %v879, %v838
  %v904 = vsel %vm896, %v866, %v839
  %v905 = vsel %vm897, %v865, %v840
  %v906 = vsel %vm898, %v864, %v841
  %v907 = vsel %vm899, %v867, %v842
  %908 = vrot.lane.b32.xlu0 %v900, 32
  %v909 = vpop.permute.xlu0 %908
  %910 = vrot.lane.b32.xlu0 %v901, 32
  %v911 = vpop.permute.xlu0 %910
  %912 = vrot.lane.b32.xlu0 %v902, 32
  %v913 = vpop.permute.xlu0 %912
  %914 = vrot.lane.b32.xlu0 %v903, 32
  %v915 = vpop.permute.xlu0 %914
  %vm916 = vcmp.lt.s32.totalorder %v254, 32
  %v917 = vsel %vm916, %v913, %v915
  %v918 = vsel %vm916, %v911, %v913
  %v919 = vsel %vm916, %v909, %v911
  %v920 = vsel %vm916, %v915, %v909
  %921 = vrot.lane.b32.xlu0 %v904, 32
  %v922 = vpop.permute.xlu0 %921
  %923 = vrot.lane.b32.xlu0 %v905, 32
  %v924 = vpop.permute.xlu0 %923
  %925 = vrot.lane.b32.xlu0 %v906, 32
  %v926 = vpop.permute.xlu0 %925
  %927 = vrot.lane.b32.xlu0 %v907, 32
  %v928 = vpop.permute.xlu0 %927
  %v929 = vsel %vm916, %v926, %v928
  %v930 = vsel %vm916, %v924, %v926
  %v931 = vsel %vm916, %v922, %v924
  %v932 = vsel %vm916, %v928, %v922
  %v933 = vxor.u32 %v932, %v254
  %v934 = vxor.u32 %v931, %v255
  %v935 = vxor.u32 %v930, %v256
  %v936 = vxor.u32 %v929, %v257
  %vm937 = vcmp.lt.s32.totalorder %v933, 64
  %vm938 = vcmp.lt.s32.totalorder %v934, 64
  %vm939 = vcmp.lt.s32.totalorder %v935, 64
  %vm940 = vcmp.lt.s32.totalorder %v936, 64
  %v941 = vsel %vm937, %v920, inf
  %v942 = vsel %vm938, %v919, inf
  %v943 = vsel %vm939, %v918, inf
  %v944 = vsel %vm940, %v917, inf
  %vm945 = vcmp.lt.f32.partialorder %v941, %v900
  %vm946 = vcmp.lt.f32.partialorder %v942, %v901
  %vm947 = vcmp.lt.f32.partialorder %v943, %v902
  %vm948 = vcmp.lt.f32.partialorder %v944, %v903
  %vm949 = vcmp.eq.f32.partialorder %v941, %v900
  %vm950 = vcmp.eq.f32.partialorder %v942, %v901
  %vm951 = vcmp.eq.f32.partialorder %v943, %v902
  %vm952 = vcmp.eq.f32.partialorder %v944, %v903
  %vm953 = vcmp.lt.s32.totalorder %v932, %v904
  %vm954 = vcmp.lt.s32.totalorder %v931, %v905
  %vm955 = vcmp.lt.s32.totalorder %v930, %v906
  %vm956 = vcmp.lt.s32.totalorder %v929, %v907
  %vm957 = vmand %vm949, %vm953
  %vm958 = vmand %vm950, %vm954
  %vm959 = vmand %vm951, %vm955
  %vm960 = vmand %vm952, %vm956
  %vm961 = vmor %vm945, %vm957
  %vm962 = vmor %vm946, %vm958
  %vm963 = vmor %vm947, %vm959
  %vm964 = vmor %vm948, %vm960
  %v965 = vsel %vm961, %v941, %v900
  %v966 = vsel %vm962, %v942, %v901
  %v967 = vsel %vm963, %v943, %v902
  %v968 = vsel %vm964, %v944, %v903
  %v969 = vsel %vm961, %v932, %v904
  %v970 = vsel %vm962, %v931, %v905
  %v971 = vsel %vm963, %v930, %v906
  %v972 = vsel %vm964, %v929, %v907
  %973 = vrot.lane.b32.xlu0 %v965, 96
  %v974 = vpop.permute.xlu0 %973
  %975 = vrot.lane.b32.xlu0 %v966, 96
  %v976 = vpop.permute.xlu0 %975
  %977 = vrot.lane.b32.xlu0 %v967, 96
  %v978 = vpop.permute.xlu0 %977
  %979 = vrot.lane.b32.xlu0 %v968, 96
  %v980 = vpop.permute.xlu0 %979
  %vm981 = vcmp.lt.s32.totalorder %v254, 96
  %v982 = vsel %vm981, %v978, %v980
  %v983 = vsel %vm981, %v976, %v978
  %v984 = vsel %vm981, %v974, %v976
  %v985 = vsel %vm981, %v980, %v974
  %986 = vrot.lane.b32.xlu0 %v969, 96
  %v987 = vpop.permute.xlu0 %986
  %988 = vrot.lane.b32.xlu0 %v970, 96
  %v989 = vpop.permute.xlu0 %988
  %990 = vrot.lane.b32.xlu0 %v971, 96
  %v991 = vpop.permute.xlu0 %990
  %992 = vrot.lane.b32.xlu0 %v972, 96
  %v993 = vpop.permute.xlu0 %992
  %v994 = vsel %vm981, %v991, %v993
  %v995 = vsel %vm981, %v989, %v991
  %v996 = vsel %vm981, %v987, %v989
  %v997 = vsel %vm981, %v993, %v987
  %v998 = vxor.u32 %v996, %v254
  %v999 = vxor.u32 %v995, %v255
  %v1000 = vxor.u32 %v994, %v256
  %v1001 = vxor.u32 %v997, %v257
  %vm1002 = vcmp.lt.s32.totalorder %v998, 64
  %vm1003 = vcmp.lt.s32.totalorder %v999, 64
  %vm1004 = vcmp.lt.s32.totalorder %v1000, 64
  %vm1005 = vcmp.lt.s32.totalorder %v1001, 64
  %v1006 = vsel %vm1002, %v984, inf
  %v1007 = vsel %vm1003, %v983, inf
  %v1008 = vsel %vm1004, %v982, inf
  %v1009 = vsel %vm1005, %v985, inf
  %vm1010 = vcmp.lt.f32.partialorder %v1006, %v965
  %vm1011 = vcmp.lt.f32.partialorder %v1007, %v966
  %vm1012 = vcmp.lt.f32.partialorder %v1008, %v967
  %vm1013 = vcmp.lt.f32.partialorder %v1009, %v968
  %vm1014 = vcmp.eq.f32.partialorder %v1006, %v965
  %vm1015 = vcmp.eq.f32.partialorder %v1007, %v966
  %vm1016 = vcmp.eq.f32.partialorder %v1008, %v967
  %vm1017 = vcmp.eq.f32.partialorder %v1009, %v968
  %vm1018 = vcmp.lt.s32.totalorder %v996, %v969
  %vm1019 = vcmp.lt.s32.totalorder %v995, %v970
  %vm1020 = vcmp.lt.s32.totalorder %v994, %v971
  %vm1021 = vcmp.lt.s32.totalorder %v997, %v972
  %vm1022 = vmand %vm1014, %vm1018
  %vm1023 = vmand %vm1015, %vm1019
  %vm1024 = vmand %vm1016, %vm1020
  %vm1025 = vmand %vm1017, %vm1021
  %vm1026 = vmor %vm1010, %vm1022
  %vm1027 = vmor %vm1011, %vm1023
  %vm1028 = vmor %vm1012, %vm1024
  %vm1029 = vmor %vm1013, %vm1025
  %v1030 = vsel %vm1026, %v996, %v969
  %v1031 = vsel %vm1027, %v995, %v970
  %v1032 = vsel %vm1028, %v994, %v971
  %v1033 = vsel %vm1029, %v997, %v972
  %vm1034 = vcmp.eq.s32.totalorder %v1030, %v254
  %vm1035 = vcmp.eq.s32.totalorder %v1031, %v255
  %vm1036 = vcmp.eq.s32.totalorder %v1032, %v256
  %vm1037 = vcmp.eq.s32.totalorder %v1033, %v257
  %v1038 = vsel %vm1034, 1, 0
  %v1039 = vsel %vm1035, 1, 0
  %v1040 = vsel %vm1036, 1, 0
  %v1041 = vsel %vm1037, 1, 0
  %v1042 = vcvt.s32.f32 %v1038
  %v1043 = vcvt.s32.f32 %v1039
  %v1044 = vcvt.s32.f32 %v1040
  %v1045 = vcvt.s32.f32 %v1041
  %1046 = vmatprep.subr.mxu0 0.0
  %1047 = vmatpush1.msra.mxu0 %v17
  %1048 = vmatprep.subr.mxu0 0.0
  %1049 = vmatpush1.msra.mxu0 %v18
  %1050 = vmatprep.subr.mxu0 0.0
  %1051 = vmatpush1.msra.mxu0 %v19
  %1052 = vmatprep.subr.mxu0 0.0
  %1053 = vmatpush1.msra.mxu0 %v20
  %1054 = vmatprep.subr.mxu0 0.0
  %1055 = vmatpush1.msra.mxu0 %v21
  %1056 = vmatprep.subr.mxu0 0.0
  %1057 = vmatpush1.msra.mxu0 %v22
  %1058 = vmatprep.subr.mxu0 0.0
  %1059 = vmatpush1.msra.mxu0 %v23
  %1060 = vmatprep.subr.mxu0 0.0
  %1061 = vmatpush1.msra.mxu0 %v24
  %1062 = vmatprep.subr.mxu0 0.0
  %1063 = vmatpush1.msra.mxu0 %v25
  %1064 = vmatprep.subr.mxu0 0.0
  %1065 = vmatpush1.msra.mxu0 %v26
  %1066 = vmatprep.subr.mxu0 0.0
  %1067 = vmatpush1.msra.mxu0 %v27
  %1068 = vmatprep.subr.mxu0 0.0
  %1069 = vmatpush1.msra.mxu0 %v28
  %1070 = vmatprep.subr.mxu0 0.0
  %1071 = vmatpush1.msra.mxu0 %v29
  %1072 = vmatprep.subr.mxu0 0.0
  %1073 = vmatpush1.msra.mxu0 %v30
  %1074 = vmatprep.subr.mxu0 0.0
  %1075 = vmatpush1.msra.mxu0 %v31
  %1076 = vmatprep.subr.mxu0 0.0
  %1077 = vmatpush1.msra.mxu0 %v32
  %1078 = vmatprep.subr.mxu0 0.0
  %1079 = vmatpush1.msra.mxu0 %v33
  %1080 = vmatprep.subr.mxu0 0.0
  %1081 = vmatpush1.msra.mxu0 %v34
  %1082 = vmatprep.subr.mxu0 0.0
  %1083 = vmatpush1.msra.mxu0 %v35
  %1084 = vmatprep.subr.mxu0 0.0
  %1085 = vmatpush1.msra.mxu0 %v36
  %1086 = vmatprep.subr.mxu0 0.0
  %1087 = vmatpush1.msra.mxu0 %v37
  %1088 = vmatprep.subr.mxu0 0.0
  %1089 = vmatpush1.msra.mxu0 %v38
  %1090 = vmatprep.subr.mxu0 0.0
  %1091 = vmatpush1.msra.mxu0 %v39
  %1092 = vmatprep.subr.mxu0 0.0
  %1093 = vmatpush1.msra.mxu0 %v40
  %1094 = vmatprep.subr.mxu0 0.0
  %1095 = vmatpush1.msra.mxu0 %v41
  %1096 = vmatprep.subr.mxu0 0.0
  %1097 = vmatpush1.msra.mxu0 %v42
  %1098 = vmatprep.subr.mxu0 0.0
  %1099 = vmatpush1.msra.mxu0 %v43
  %1100 = vmatprep.subr.mxu0 0.0
  %1101 = vmatpush1.msra.mxu0 %v44
  %1102 = vmatprep.subr.mxu0 0.0
  %1103 = vmatpush1.msra.mxu0 %v45
  %1104 = vmatprep.subr.mxu0 0.0
  %1105 = vmatpush1.msra.mxu0 %v46
  %1106 = vmatprep.subr.mxu0 0.0
  %1107 = vmatpush1.msra.mxu0 %v47
  %1108 = vmatprep.subr.mxu0 0.0
  %1109 = vmatpush1.msra.mxu0 %v48
  %1110 = vmatprep.mubr.f32.mxu0 %v1043
  %1111 = vmatmul.mubr.f32.gmra.mrb[0].mxu0 %v1042
  %v1112 = vpop.f32.mrb[0].mxu0
  %v1113 = vadd.f32 0.0, %v1112
  %v1114 = vpop.f32.mrb[0].mxu0
  %1115 = vdwg.mxu0
  %1116 = vmatprep.subr.mxu0 0.0
  %1117 = vmatpush1.msra.mxu0 %v49
  %1118 = vmatprep.subr.mxu0 0.0
  %1119 = vmatpush1.msra.mxu0 %v50
  %1120 = vmatprep.subr.mxu0 0.0
  %1121 = vmatpush1.msra.mxu0 %v51
  %1122 = vmatprep.subr.mxu0 0.0
  %1123 = vmatpush1.msra.mxu0 %v52
  %1124 = vmatprep.subr.mxu0 0.0
  %1125 = vmatpush1.msra.mxu0 %v53
  %1126 = vmatprep.subr.mxu0 0.0
  %1127 = vmatpush1.msra.mxu0 %v54
  %1128 = vmatprep.subr.mxu0 0.0
  %1129 = vmatpush1.msra.mxu0 %v55
  %1130 = vmatprep.subr.mxu0 0.0
  %1131 = vmatpush1.msra.mxu0 %v56
  %1132 = vmatprep.subr.mxu0 0.0
  %1133 = vmatpush1.msra.mxu0 %v57
  %1134 = vmatprep.subr.mxu0 0.0
  %1135 = vmatpush1.msra.mxu0 %v58
  %1136 = vmatprep.subr.mxu0 0.0
  %1137 = vmatpush1.msra.mxu0 %v59
  %1138 = vmatprep.subr.mxu0 0.0
  %1139 = vmatpush1.msra.mxu0 %v60
  %1140 = vmatprep.subr.mxu0 0.0
  %1141 = vmatpush1.msra.mxu0 %v61
  %1142 = vmatprep.subr.mxu0 0.0
  %1143 = vmatpush1.msra.mxu0 %v62
  %1144 = vmatprep.subr.mxu0 0.0
  %1145 = vmatpush1.msra.mxu0 %v63
  %1146 = vmatprep.subr.mxu0 0.0
  %1147 = vmatpush1.msra.mxu0 %v64
  %1148 = vmatprep.subr.mxu0 0.0
  %1149 = vmatpush1.msra.mxu0 %v65
  %1150 = vmatprep.subr.mxu0 0.0
  %1151 = vmatpush1.msra.mxu0 %v66
  %1152 = vmatprep.subr.mxu0 0.0
  %1153 = vmatpush1.msra.mxu0 %v67
  %1154 = vmatprep.subr.mxu0 0.0
  %1155 = vmatpush1.msra.mxu0 %v68
  %1156 = vmatprep.subr.mxu0 0.0
  %1157 = vmatpush1.msra.mxu0 %v69
  %1158 = vmatprep.subr.mxu0 0.0
  %1159 = vmatpush1.msra.mxu0 %v70
  %1160 = vmatprep.subr.mxu0 0.0
  %1161 = vmatpush1.msra.mxu0 %v71
  %1162 = vmatprep.subr.mxu0 0.0
  %1163 = vmatpush1.msra.mxu0 %v72
  %1164 = vmatprep.subr.mxu0 0.0
  %1165 = vmatpush1.msra.mxu0 %v73
  %1166 = vmatprep.subr.mxu0 0.0
  %1167 = vmatpush1.msra.mxu0 %v74
  %1168 = vmatprep.subr.mxu0 0.0
  %1169 = vmatpush1.msra.mxu0 %v75
  %1170 = vmatprep.subr.mxu0 0.0
  %1171 = vmatpush1.msra.mxu0 %v76
  %1172 = vmatprep.subr.mxu0 0.0
  %1173 = vmatpush1.msra.mxu0 %v77
  %1174 = vmatprep.subr.mxu0 0.0
  %1175 = vmatpush1.msra.mxu0 %v78
  %1176 = vmatprep.subr.mxu0 0.0
  %1177 = vmatpush1.msra.mxu0 %v79
  %1178 = vmatprep.subr.mxu0 0.0
  %1179 = vmatpush1.msra.mxu0 %v80
  %1180 = vmatprep.mubr.f32.mxu0 %v1045
  %1181 = vmatmul.mubr.f32.gmra.mrb[0].mxu0 %v1044
  %v1182 = vpop.f32.mrb[0].mxu0
  %v1183 = vadd.f32 %v1113, %v1182
  %v1184 = vpop.f32.mrb[0].mxu0
  %1185 = vdwg.mxu0
  %1186 = vst [vmem:[%s3] sm:$0xff] %v1183
  %v1187 = vsub.f32 %v1183, %v16
  %v1188 = vmul.f32 %v1187, %v1187
  %1189 = vadd.xlane.f32.xlu0 %v1188
  %v1190 = vpop.xlane.xlu0 %1189
  %vm1191 = vcmask 7168
  %1192 = vst.msk [vmem:[%s4] sm:$0xff] %vm1191, %v1190
  // Predicated region
  $region14: #{clip_quantized_forward.2} parent=0 // pred_check
    _
  $region15: #{clip_quantized_forward.2} parent=0 // pred_check_branch
    %1194 = sbr.rel (0) target = $region17
  $region16: #{clip_quantized_forward.2} parent=0 // pred_region
    _
  $region17: #{clip_quantized_forward.2} parent=0 // pred_fallthru
    _
  // Predicated region
  $region18: #{clip_quantized_forward.2} parent=0 // pred_check
    _
  $region19: #{clip_quantized_forward.2} parent=0 // pred_check_branch
    %1196 = sbr.rel (0) target = $region21
  $region20: #{clip_quantized_forward.2} parent=0 // pred_region
    _
  $region21: #{clip_quantized_forward.2} parent=0 // pred_fallthru
    _
  // Predicated region
  $region22: #{clip_quantized_forward.2} parent=0 // pred_check
    _
  $region23: #{clip_quantized_forward.2} parent=0 // pred_check_branch
    %1198 = sbr.rel (0) target = $region25
  $region24: #{clip_quantized_forward.2} parent=0 // pred_region
    _
  $region25: #{clip_quantized_forward.2} parent=0 // pred_fallthru
    _
  // Predicated region
  $region26: #{clip_quantized_forward.2} parent=0 // pred_check
    _
  $region27: #{clip_quantized_forward.2} parent=0 // pred_check_branch
    %1200 = sbr.rel (0) target = $region29
  $region28: #{clip_quantized_forward.2} parent=0 // pred_region
    _
  $region29: #{clip_quantized_forward.2} parent=0 // pred_fallthru
    _

</llo_original>
